<compile_context>
chip_gen: v5e
topology: v5e:2x2
jax: 0.10.0
libtpu: 0.0.40
codegen_flags: <defaults>
</compile_context>

<pallas_src>
import jax
import jax.numpy as jnp
from jax.experimental import pallas as pl
from jax.experimental.pallas import tpu as pltpu


def _round_up(x, m):
    return ((x + m - 1) // m) * m


def _pad_gate_cols(x, d, dp):
    """Pad a trailing 4*d gate axis to 4*dp, gate block by gate block."""
    if d == dp:
        return x
    lead = x.shape[:-1]
    x4 = x.reshape(lead + (4, d))
    x4 = jnp.pad(x4, [(0, 0)] * len(lead) + [(0, 0), (0, dp - d)])
    return x4.reshape(lead + (4 * dp,))


# ----------------------------------------------------------------------------
# Pallas kernel: one grid step == one chunk of Tc decoding timesteps.
# Persistent VMEM scratch carries (h, c) across chunks; at chunk 0 they are
# initialized from the precomputed h0/c0.  Rows with decode_length <= t are
# inactive: h/c frozen, prediction row written as zeros (== predictions[:bt,t]).
# ----------------------------------------------------------------------------
def decoder_chunk_kernel(dl_ref, h0_ref, c0_ref, keyg_ref, cap_ref,
                         w_xh_ref, w_fc_ref, b_fc_ref,
                         pred_ref,
                         h_sc, c_sc):
    g = pl.program_id(0)
    Tc = cap_ref.shape[0]
    D = h_sc.shape[-1]

    @pl.when(g == 0)
    def _():
        h_sc[...] = h0_ref[...]
        c_sc[...] = c0_ref[...]

    # Hoisted loads (grid/time invariant within the chunk).
    key_gates = keyg_ref[...]        # (B, 4D): key_emb @ W_ih_key^T + b_ih + b_hh
    dl = dl_ref[...]                 # (B, 1) int32 decode lengths
    w_xh = w_xh_ref[...]             # (E + D, 4D) fused [W_ih_cap ; W_hh]^T
    w_fc = w_fc_ref[...]             # (D, V)
    b_fc = b_fc_ref[...]             # (1, V)
    t_base = g * Tc

    def step(i, carry):
        h_prev, c_prev = carry
        x_cap = cap_ref[i]                                   # (B, E)
        xh = jnp.concatenate([x_cap, h_prev], axis=-1)       # (B, E + D)
        # Single fused MXU call for all four gates.
        gates = (jnp.dot(xh, w_xh, preferred_element_type=jnp.float32)
                 + key_gates)
        i_g = jax.nn.sigmoid(gates[:, 0 * D:1 * D])
        f_g = jax.nn.sigmoid(gates[:, 1 * D:2 * D])
        g_g = jnp.tanh(gates[:, 2 * D:3 * D])
        o_g = jax.nn.sigmoid(gates[:, 3 * D:4 * D])
        c_new = f_g * c_prev + i_g * g_g
        h_new = o_g * jnp.tanh(c_new)

        mask = dl > (t_base + i)                             # (B, 1) bool
        # fc(dropout(h)); dropout == identity (eval mode).
        preds = (jnp.dot(h_new, w_fc, preferred_element_type=jnp.float32)
                 + b_fc)
        pred_ref[i] = jnp.where(mask, preds, 0.0)
        return (jnp.where(mask, h_new, h_prev),
                jnp.where(mask, c_new, c_prev))

    h_fin, c_fin = jax.lax.fori_loop(0, Tc, step,
                                     (h_sc[...], c_sc[...]), unroll=True)
    h_sc[...] = h_fin
    c_sc[...] = c_fin


def lstm_decode_pallas(decode_lengths, cap_emb_tmajor, h0, c0, key_gates,
                       w_ih_cap_T, w_hh_T, w_fc_T, b_fc, *, time_chunk=8):
    """Runs the per-timestep LSTM + FC loop on TPU via pallas_call."""
    T, B, E = cap_emb_tmajor.shape
    D = w_hh_T.shape[0]
    V = w_fc_T.shape[1]
    f32 = jnp.float32

    # --- TPU-friendly padded shapes ------------------------------------------
    Bp = max(8, _round_up(B, 8))          # sublane fill
    Dp = _round_up(D, 128)                # lane-aligned gate slices
    Ep = _round_up(E, 128)                # lane-aligned concat with h
    Vp = _round_up(V, 128)                # unmasked lane-dense pred stores
    Tc = int(time_chunk)
    Tp = _round_up(max(T, 1), Tc)

    cap_p = jnp.zeros((Tp, Bp, Ep), f32).at[:T, :B, :E].set(
        cap_emb_tmajor.astype(f32))
    h0_p = jnp.zeros((Bp, Dp), f32).at[:B, :D].set(h0.astype(f32))
    c0_p = jnp.zeros((Bp, Dp), f32).at[:B, :D].set(c0.astype(f32))
    keyg_p = jnp.zeros((Bp, 4 * Dp), f32).at[:B, :].set(
        _pad_gate_cols(key_gates.astype(f32), D, Dp))
    dl_p = jnp.zeros((Bp, 1), jnp.int32).at[:B, 0].set(
        decode_lengths.astype(jnp.int32))

    w_cap_p = jnp.zeros((Ep, 4 * Dp), f32).at[:E, :].set(
        _pad_gate_cols(w_ih_cap_T.astype(f32), D, Dp))
    w_hh_p = jnp.zeros((Dp, 4 * Dp), f32).at[:D, :].set(
        _pad_gate_cols(w_hh_T.astype(f32), D, Dp))
    w_xh_p = jnp.concatenate([w_cap_p, w_hh_p], axis=0)       # (Ep+Dp, 4Dp)

    w_fc_p = jnp.zeros((Dp, Vp), f32).at[:D, :V].set(w_fc_T.astype(f32))
    b_fc_p = jnp.zeros((1, Vp), f32).at[:, :V].set(b_fc.astype(f32))

    grid_spec = pltpu.PrefetchScalarGridSpec(
        num_scalar_prefetch=0,
        grid=(Tp // Tc,),
        in_specs=[
            pl.BlockSpec((Bp, 1), lambda g: (0, 0)),           # decode lengths
            pl.BlockSpec((Bp, Dp), lambda g: (0, 0)),          # h0
            pl.BlockSpec((Bp, Dp), lambda g: (0, 0)),          # c0
            pl.BlockSpec((Bp, 4 * Dp), lambda g: (0, 0)),      # key gates (+bias)
            pl.BlockSpec((Tc, Bp, Ep), lambda g: (g, 0, 0)),   # cap emb chunk
            pl.BlockSpec((Ep + Dp, 4 * Dp), lambda g: (0, 0)), # fused [Wih_cap;Whh]^T
            pl.BlockSpec((Dp, Vp), lambda g: (0, 0)),          # fc W^T
            pl.BlockSpec((1, Vp), lambda g: (0, 0)),           # fc b
        ],
        out_specs=pl.BlockSpec((Tc, Bp, Vp), lambda g: (g, 0, 0)),
        scratch_shapes=[pltpu.VMEM((Bp, Dp), f32),             # h carry
                        pltpu.VMEM((Bp, Dp), f32)],            # c carry
    )

    preds_tmajor = pl.pallas_call(
        decoder_chunk_kernel,
        grid_spec=grid_spec,
        out_shape=jax.ShapeDtypeStruct((Tp, Bp, Vp), f32),
        compiler_params=pltpu.CompilerParams(
            dimension_semantics=("arbitrary",)),
    )(dl_p, h0_p, c0_p, keyg_p, cap_p, w_xh_p, w_fc_p, b_fc_p)

    # Strip padding and return PyTorch layout (B, T, vocab).
    # TODO(synk): keep consumers time-major to avoid this extra HBM pass.
    return jnp.transpose(preds_tmajor[:T, :B, :V], (1, 0, 2))


# ----------------------------------------------------------------------------
# Parameter construction (deterministic, mirrors the nn.Module shapes)
# ----------------------------------------------------------------------------
def init_decoder_params(key, embed_dim, decoder_dim, vocab_size, keyword_size):
    encoder_dim = embed_dim * keyword_size
    in_dim = embed_dim + encoder_dim
    ks = jax.random.split(key, 12)

    def unif(k, shape, a):
        return jax.random.uniform(k, shape, jnp.float32, -a, a)

    # embedding: uniform(-0.1, 0.1)  (as in init_weights)
    embedding = unif(ks[0], (vocab_size, embed_dim), 0.1)

    # LSTMCell params (PyTorch gate order: i, f, g, o)
    s = 1.0 / jnp.sqrt(decoder_dim)
    w_ih = unif(ks[1], (4 * decoder_dim, in_dim), s)
    w_hh = unif(ks[2], (4 * decoder_dim, decoder_dim), s)
    b_ih = unif(ks[3], (4 * decoder_dim,), s)
    b_hh = unif(ks[4], (4 * decoder_dim,), s)

    # init_h / init_c linears
    sh = 1.0 / jnp.sqrt(encoder_dim)
    w_h = unif(ks[5], (decoder_dim, encoder_dim), sh)
    b_h = unif(ks[6], (decoder_dim,), sh)
    w_c = unif(ks[7], (decoder_dim, encoder_dim), sh)
    b_c = unif(ks[8], (decoder_dim,), sh)

    # fc: weight uniform(-0.1, 0.1), bias 0  (as in init_weights)
    w_fc = unif(ks[9], (vocab_size, decoder_dim), 0.1)
    b_fc = jnp.zeros((vocab_size,), jnp.float32)

    w_ih_T = w_ih.T  # (in_dim, 4D)
    params = dict(
        embedding=embedding,
        w_ih_cap_T=w_ih_T[:embed_dim, :],
        w_ih_key_T=w_ih_T[embed_dim:, :],
        w_hh_T=w_hh.T,
        b_gates=(b_ih + b_hh).reshape(1, -1),
        w_h_T=w_h.T, b_h=b_h.reshape(1, -1),
        w_c_T=w_c.T, b_c=b_c.reshape(1, -1),
        w_fc_T=w_fc.T, b_fc=b_fc.reshape(1, -1),
    )
    return params


# ----------------------------------------------------------------------------
# Full Decoder.forward (sort + gathers + time-invariant matmuls are JAX glue,
# the recurrent hot loop is the Pallas kernel)
# ----------------------------------------------------------------------------
def decoder_forward(params, encoded_keywords, encoded_captions, caption_lengths,
                    embed_dim, keyword_size, time_chunk=8):
    B = encoded_keywords.shape[0]
    encoder_dim = embed_dim * keyword_size

    cl = caption_lengths[:, 0]
    sort_ind = jnp.argsort(-cl)                      # descending sort
    cl_sorted = cl[sort_ind]
    encoded_keywords = encoded_keywords[sort_ind]
    encoded_captions = encoded_captions[sort_ind]

    key_emb = params["embedding"][encoded_keywords].reshape(B, encoder_dim)
    cap_emb = params["embedding"][encoded_captions]  # (B, L, embed_dim)

    decode_lengths = cl_sorted - 1
    # TODO(synk): host sync; pass a static max length to keep this jittable.
    T = int(jnp.max(decode_lengths))

    cap_emb_tmajor = jnp.transpose(cap_emb[:, :T, :], (1, 0, 2))  # (T, B, E)

    # Hoisted time-invariant work (done once, in plain JAX):
    h0 = key_emb @ params["w_h_T"] + params["b_h"]
    c0 = key_emb @ params["w_c_T"] + params["b_c"]
    key_gates = key_emb @ params["w_ih_key_T"] + params["b_gates"]

    predictions = lstm_decode_pallas(
        decode_lengths, cap_emb_tmajor, h0, c0, key_gates,
        params["w_ih_cap_T"], params["w_hh_T"], params["w_fc_T"],
        params["b_fc"], time_chunk=time_chunk)
    return predictions, encoded_captions, decode_lengths, sort_ind


# ----------------------------------------------------------------------------
# Pure-JAX reference (mirrors the PyTorch loop) for a correctness check.
# ----------------------------------------------------------------------------
def decoder_reference(params, key_emb, cap_emb, decode_lengths, T):
    B = key_emb.shape[0]
    D = params["w_hh_T"].shape[0]
    V = params["w_fc_T"].shape[1]
    h = key_emb @ params["w_h_T"] + params["b_h"]
    c = key_emb @ params["w_c_T"] + params["b_c"]
    preds = jnp.zeros((B, T, V), jnp.float32)
    for t in range(T):
        gates = (cap_emb[:, t, :] @ params["w_ih_cap_T"]
                 + key_emb @ params["w_ih_key_T"]
                 + h @ params["w_hh_T"] + params["b_gates"])
        i_g = jax.nn.sigmoid(gates[:, 0 * D:1 * D])
        f_g = jax.nn.sigmoid(gates[:, 1 * D:2 * D])
        g_g = jnp.tanh(gates[:, 2 * D:3 * D])
        o_g = jax.nn.sigmoid(gates[:, 3 * D:4 * D])
        c_new = f_g * c + i_g * g_g
        h_new = o_g * jnp.tanh(c_new)
        mask = (decode_lengths > t)[:, None]
        h = jnp.where(mask, h_new, h)
        c = jnp.where(mask, c_new, c)
        p = jnp.where(mask, h_new @ params["w_fc_T"] + params["b_fc"], 0.0)
        preds = preds.at[:, t, :].set(p)
    return preds


if __name__ == "__main__":
    # Small, decoder-consistent shapes.
    embed_dim = 16
    decoder_dim = 32
    vocab_size = 64
    keyword_size = 5
    batch = 4
    max_cap_len = 8

    root = jax.random.PRNGKey(0)
    k_par, k_kw, k_cap = jax.random.split(root, 3)

    params = init_decoder_params(k_par, embed_dim, decoder_dim,
                                 vocab_size, keyword_size)

    encoded_keywords = jax.random.randint(
        k_kw, (batch, keyword_size), 0, vocab_size, jnp.int32)
    encoded_captions = jax.random.randint(
        k_cap, (batch, max_cap_len), 0, vocab_size, jnp.int32)
    caption_lengths = jnp.array([[8], [5], [7], [3]], jnp.int32)

    # time_chunk=4 -> T=7 pads to 8, grid=(2,), exercises cross-chunk h/c carry.
    predictions, sorted_caps, decode_lengths, sort_ind = decoder_forward(
        params, encoded_keywords, encoded_captions, caption_lengths,
        embed_dim, keyword_size, time_chunk=4)
    predictions = jax.block_until_ready(predictions)

    # Reference check.
    B = batch
    encoder_dim = embed_dim * keyword_size
    key_emb = params["embedding"][encoded_keywords[sort_ind]].reshape(
        B, encoder_dim)
    cap_emb = params["embedding"][encoded_captions[sort_ind]]
    T = predictions.shape[1]
    ref = decoder_reference(params, key_emb, cap_emb, decode_lengths, T)

    assert predictions.shape == (B, T, vocab_size)
    assert jnp.allclose(predictions, ref, atol=2e-2, rtol=2e-2), (
        float(jnp.max(jnp.abs(predictions - ref))))

    print("KERNEL_OK")
</pallas_src>

<mosaic_0001>
module attributes {stable_mosaic.version = 11 : i64} {
  func.func @decoder_chunk_kernel(%arg0: i32, %arg1: memref<8x1xi32, #tpu.memory_space<vmem>>, %arg2: memref<8x128xf32, #tpu.memory_space<vmem>>, %arg3: memref<8x128xf32, #tpu.memory_space<vmem>>, %arg4: memref<8x512xf32, #tpu.memory_space<vmem>>, %arg5: memref<4x8x128xf32, #tpu.memory_space<vmem>>, %arg6: memref<256x512xf32, #tpu.memory_space<vmem>>, %arg7: memref<128x128xf32, #tpu.memory_space<vmem>>, %arg8: memref<1x128xf32, #tpu.memory_space<vmem>>, %arg9: memref<4x8x128xf32, #tpu.memory_space<vmem>>, %arg10: memref<8x128xf32, #tpu.memory_space<vmem>>, %arg11: memref<8x128xf32, #tpu.memory_space<vmem>>) attributes {dimension_semantics = [#tpu.dimension_semantics<arbitrary>], iteration_bounds = array<i64: 2>, scalar_prefetch = 0 : i64, scratch_operands = 2 : i64, tpu.core_type = #tpu.core_type<tc>, window_params = [{pipeline_mode = #tpu.pipeline_mode<synchronous>, transform_indices = @transform_0, window_bounds = array<i64: 8, 1>}, {pipeline_mode = #tpu.pipeline_mode<synchronous>, transform_indices = @transform_1, window_bounds = array<i64: 8, 128>}, {pipeline_mode = #tpu.pipeline_mode<synchronous>, transform_indices = @transform_2, window_bounds = array<i64: 8, 128>}, {pipeline_mode = #tpu.pipeline_mode<synchronous>, transform_indices = @transform_3, window_bounds = array<i64: 8, 512>}, {transform_indices = @transform_4, window_bounds = array<i64: 4, 8, 128>}, {pipeline_mode = #tpu.pipeline_mode<synchronous>, transform_indices = @transform_5, window_bounds = array<i64: 256, 512>}, {pipeline_mode = #tpu.pipeline_mode<synchronous>, transform_indices = @transform_6, window_bounds = array<i64: 128, 128>}, {pipeline_mode = #tpu.pipeline_mode<synchronous>, transform_indices = @transform_7, window_bounds = array<i64: 1, 128>}, {transform_indices = @transform_8, window_bounds = array<i64: 4, 8, 128>}]} {
    %c0_i32 = arith.constant 0 : i32
    %0 = arith.cmpi eq, %arg0, %c0_i32 : i32
    %1 = arith.extui %0 : i1 to i32
    %c0_i32_0 = arith.constant 0 : i32
    %2 = arith.cmpi ne, %1, %c0_i32_0 : i32
    scf.if %2 {
      %c0_59 = arith.constant 0 : index
      %c0_60 = arith.constant 0 : index
      %217 = vector.load %arg2[%c0_59, %c0_60] : memref<8x128xf32, #tpu.memory_space<vmem>>, vector<8x128xf32>
      %c0_61 = arith.constant 0 : index
      %c0_62 = arith.constant 0 : index
      %218 = vector.load %arg10[%c0_61, %c0_62] : memref<8x128xf32, #tpu.memory_space<vmem>>, vector<8x128xf32>
      tpu.vector_store %arg10[%c0_61, %c0_62], %217 {strides = array<i32>} : memref<8x128xf32, #tpu.memory_space<vmem>>, vector<8x128xf32>,
      %c0_63 = arith.constant 0 : index
      %c0_64 = arith.constant 0 : index
      %219 = vector.load %arg3[%c0_63, %c0_64] : memref<8x128xf32, #tpu.memory_space<vmem>>, vector<8x128xf32>
      %c0_65 = arith.constant 0 : index
      %c0_66 = arith.constant 0 : index
      %220 = vector.load %arg11[%c0_65, %c0_66] : memref<8x128xf32, #tpu.memory_space<vmem>>, vector<8x128xf32>
      tpu.vector_store %arg11[%c0_65, %c0_66], %219 {strides = array<i32>} : memref<8x128xf32, #tpu.memory_space<vmem>>, vector<8x128xf32>,
    } else {
    }
    %c0 = arith.constant 0 : index
    %c0_1 = arith.constant 0 : index
    %3 = vector.load %arg4[%c0, %c0_1] : memref<8x512xf32, #tpu.memory_space<vmem>>, vector<8x512xf32>
    %c0_2 = arith.constant 0 : index
    %c0_3 = arith.constant 0 : index
    %4 = vector.load %arg1[%c0_2, %c0_3] : memref<8x1xi32, #tpu.memory_space<vmem>>, vector<8x1xi32>
    %c0_4 = arith.constant 0 : index
    %c0_5 = arith.constant 0 : index
    %5 = vector.load %arg6[%c0_4, %c0_5] : memref<256x512xf32, #tpu.memory_space<vmem>>, vector<256x512xf32>
    %c0_6 = arith.constant 0 : index
    %c0_7 = arith.constant 0 : index
    %6 = vector.load %arg7[%c0_6, %c0_7] : memref<128x128xf32, #tpu.memory_space<vmem>>, vector<128x128xf32>
    %c0_8 = arith.constant 0 : index
    %c0_9 = arith.constant 0 : index
    %7 = vector.load %arg8[%c0_8, %c0_9] : memref<1x128xf32, #tpu.memory_space<vmem>>, vector<1x128xf32>
    %c4_i32 = arith.constant 4 : i32
    %8 = arith.muli %arg0, %c4_i32 : i32
    %c0_10 = arith.constant 0 : index
    %c0_11 = arith.constant 0 : index
    %9 = vector.load %arg10[%c0_10, %c0_11] : memref<8x128xf32, #tpu.memory_space<vmem>>, vector<8x128xf32>
    %c0_12 = arith.constant 0 : index
    %c0_13 = arith.constant 0 : index
    %10 = vector.load %arg11[%c0_12, %c0_13] : memref<8x128xf32, #tpu.memory_space<vmem>>, vector<8x128xf32>
    %c0_i32_14 = arith.constant 0 : i32
    %11 = arith.index_cast %c0_i32_14 : i32 to index
    %c0_15 = arith.constant 0 : index
    %c0_16 = arith.constant 0 : index
    %12 = vector.load %arg5[%11, %c0_15, %c0_16] : memref<4x8x128xf32, #tpu.memory_space<vmem>>, vector<1x8x128xf32>
    %13 = vector.shape_cast %12 : vector<1x8x128xf32> to vector<8x128xf32>
    %14 = tpu.concatenate %13, %9 in 1 : vector<8x128xf32>, vector<8x128xf32> -> vector<8x256xf32>
    %cst = arith.constant dense<0.000000e+00> : vector<8x512xf32>
    %15 = tpu.matmul %14, %5, %cst {dimension_numbers = #tpu.dot_dimension_numbers<[1], [0], [0], [1], [0, 0, 1, 1], [], []>} : vector<8x256xf32>, vector<256x512xf32>, vector<8x512xf32> -> vector<8x512xf32>
    %16 = arith.addf %15, %3 : vector<8x512xf32>
    %17 = vector.extract_strided_slice %16 {offsets = [0, 0], sizes = [8, 128], strides = [1, 1]} : vector<8x512xf32> to vector<8x128xf32>
    %18 = arith.negf %17 : vector<8x128xf32>
    %19 = math.exp %18 : vector<8x128xf32>
    %cst_17 = arith.constant 1.000000e+00 : f32
    %20 = vector.broadcast %cst_17 : f32 to vector<8x128xf32>
    %21 = arith.addf %20, %19 : vector<8x128xf32>
    %22 = arith.divf %20, %21 : vector<8x128xf32>
    %23 = vector.extract_strided_slice %16 {offsets = [0, 128], sizes = [8, 128], strides = [1, 1]} : vector<8x512xf32> to vector<8x128xf32>
    %24 = arith.negf %23 : vector<8x128xf32>
    %25 = math.exp %24 : vector<8x128xf32>
    %cst_18 = arith.constant 1.000000e+00 : f32
    %26 = vector.broadcast %cst_18 : f32 to vector<8x128xf32>
    %27 = arith.addf %26, %25 : vector<8x128xf32>
    %28 = arith.divf %26, %27 : vector<8x128xf32>
    %29 = vector.extract_strided_slice %16 {offsets = [0, 256], sizes = [8, 128], strides = [1, 1]} : vector<8x512xf32> to vector<8x128xf32>
    %30 = math.tanh %29 : vector<8x128xf32>
    %31 = vector.extract_strided_slice %16 {offsets = [0, 384], sizes = [8, 128], strides = [1, 1]} : vector<8x512xf32> to vector<8x128xf32>
    %32 = arith.negf %31 : vector<8x128xf32>
    %33 = math.exp %32 : vector<8x128xf32>
    %cst_19 = arith.constant 1.000000e+00 : f32
    %34 = vector.broadcast %cst_19 : f32 to vector<8x128xf32>
    %35 = arith.addf %34, %33 : vector<8x128xf32>
    %36 = arith.divf %34, %35 : vector<8x128xf32>
    %37 = arith.mulf %28, %10 : vector<8x128xf32>
    %38 = arith.mulf %22, %30 : vector<8x128xf32>
    %39 = arith.addf %37, %38 : vector<8x128xf32>
    %40 = math.tanh %39 : vector<8x128xf32>
    %41 = arith.mulf %36, %40 : vector<8x128xf32>
    %42 = arith.addi %8, %c0_i32_14 : i32
    %43 = vector.broadcast %42 : i32 to vector<8x1xi32>
    %44 = arith.cmpi sgt, %4, %43 : vector<8x1xi32>
    %cst_20 = arith.constant dense<0.000000e+00> : vector<8x128xf32>
    %45 = tpu.matmul %41, %6, %cst_20 {dimension_numbers = #tpu.dot_dimension_numbers<[1], [0], [0], [1], [0, 0, 1, 1], [], []>} : vector<8x128xf32>, vector<128x128xf32>, vector<8x128xf32> -> vector<8x128xf32>
    %46 = vector.broadcast %7 : vector<1x128xf32> to vector<8x128xf32>
    %47 = arith.addf %45, %46 : vector<8x128xf32>
    %cst_21 = arith.constant 0.000000e+00 : f32
    %48 = vector.shape_cast %44 : vector<8x1xi1> to vector<8x1xi1>
    %49 = vector.broadcast %48 : vector<8x1xi1> to vector<8x128xi1>
    %50 = vector.broadcast %cst_21 : f32 to vector<8x128xf32>
    %51 = arith.select %49, %47, %50 : vector<8x128xi1>, vector<8x128xf32>
    %52 = arith.index_cast %c0_i32_14 : i32 to index
    %c0_22 = arith.constant 0 : index
    %c0_23 = arith.constant 0 : index
    %53 = vector.load %arg9[%52, %c0_22, %c0_23] : memref<4x8x128xf32, #tpu.memory_space<vmem>>, vector<1x8x128xf32>
    %54 = vector.shape_cast %53 : vector<1x8x128xf32> to vector<8x128xf32>
    %55 = vector.shape_cast %51 : vector<8x128xf32> to vector<1x8x128xf32>
    tpu.vector_store %arg9[%52, %c0_22, %c0_23], %55 {strides = array<i32>} : memref<4x8x128xf32, #tpu.memory_space<vmem>>, vector<1x8x128xf32>,
    %56 = vector.shape_cast %44 : vector<8x1xi1> to vector<8x1xi1>
    %57 = vector.broadcast %56 : vector<8x1xi1> to vector<8x128xi1>
    %58 = arith.select %57, %41, %9 : vector<8x128xi1>, vector<8x128xf32>
    %59 = vector.shape_cast %44 : vector<8x1xi1> to vector<8x1xi1>
    %60 = vector.broadcast %59 : vector<8x1xi1> to vector<8x128xi1>
    %61 = arith.select %60, %39, %10 : vector<8x128xi1>, vector<8x128xf32>
    %c1_i32 = arith.constant 1 : i32
    %62 = arith.index_cast %c1_i32 : i32 to index
    %c0_24 = arith.constant 0 : index
    %c0_25 = arith.constant 0 : index
    %63 = vector.load %arg5[%62, %c0_24, %c0_25] : memref<4x8x128xf32, #tpu.memory_space<vmem>>, vector<1x8x128xf32>
    %64 = vector.shape_cast %63 : vector<1x8x128xf32> to vector<8x128xf32>
    %65 = tpu.concatenate %64, %58 in 1 : vector<8x128xf32>, vector<8x128xf32> -> vector<8x256xf32>
    %cst_26 = arith.constant dense<0.000000e+00> : vector<8x512xf32>
    %66 = tpu.matmul %65, %5, %cst_26 {dimension_numbers = #tpu.dot_dimension_numbers<[1], [0], [0], [1], [0, 0, 1, 1], [], []>} : vector<8x256xf32>, vector<256x512xf32>, vector<8x512xf32> -> vector<8x512xf32>
    %67 = arith.addf %66, %3 : vector<8x512xf32>
    %68 = vector.extract_strided_slice %67 {offsets = [0, 0], sizes = [8, 128], strides = [1, 1]} : vector<8x512xf32> to vector<8x128xf32>
    %69 = arith.negf %68 : vector<8x128xf32>
    %70 = math.exp %69 : vector<8x128xf32>
    %cst_27 = arith.constant 1.000000e+00 : f32
    %71 = vector.broadcast %cst_27 : f32 to vector<8x128xf32>
    %72 = arith.addf %71, %70 : vector<8x128xf32>
    %73 = arith.divf %71, %72 : vector<8x128xf32>
    %74 = vector.extract_strided_slice %67 {offsets = [0, 128], sizes = [8, 128], strides = [1, 1]} : vector<8x512xf32> to vector<8x128xf32>
    %75 = arith.negf %74 : vector<8x128xf32>
    %76 = math.exp %75 : vector<8x128xf32>
    %cst_28 = arith.constant 1.000000e+00 : f32
    %77 = vector.broadcast %cst_28 : f32 to vector<8x128xf32>
    %78 = arith.addf %77, %76 : vector<8x128xf32>
    %79 = arith.divf %77, %78 : vector<8x128xf32>
    %80 = vector.extract_strided_slice %67 {offsets = [0, 256], sizes = [8, 128], strides = [1, 1]} : vector<8x512xf32> to vector<8x128xf32>
    %81 = math.tanh %80 : vector<8x128xf32>
    %82 = vector.extract_strided_slice %67 {offsets = [0, 384], sizes = [8, 128], strides = [1, 1]} : vector<8x512xf32> to vector<8x128xf32>
    %83 = arith.negf %82 : vector<8x128xf32>
    %84 = math.exp %83 : vector<8x128xf32>
    %cst_29 = arith.constant 1.000000e+00 : f32
    %85 = vector.broadcast %cst_29 : f32 to vector<8x128xf32>
    %86 = arith.addf %85, %84 : vector<8x128xf32>
    %87 = arith.divf %85, %86 : vector<8x128xf32>
    %88 = arith.mulf %79, %61 : vector<8x128xf32>
    %89 = arith.mulf %73, %81 : vector<8x128xf32>
    %90 = arith.addf %88, %89 : vector<8x128xf32>
    %91 = math.tanh %90 : vector<8x128xf32>
    %92 = arith.mulf %87, %91 : vector<8x128xf32>
    %93 = arith.addi %8, %c1_i32 : i32
    %94 = vector.broadcast %93 : i32 to vector<8x1xi32>
    %95 = arith.cmpi sgt, %4, %94 : vector<8x1xi32>
    %cst_30 = arith.constant dense<0.000000e+00> : vector<8x128xf32>
    %96 = tpu.matmul %92, %6, %cst_30 {dimension_numbers = #tpu.dot_dimension_numbers<[1], [0], [0], [1], [0, 0, 1, 1], [], []>} : vector<8x128xf32>, vector<128x128xf32>, vector<8x128xf32> -> vector<8x128xf32>
    %97 = vector.broadcast %7 : vector<1x128xf32> to vector<8x128xf32>
    %98 = arith.addf %96, %97 : vector<8x128xf32>
    %cst_31 = arith.constant 0.000000e+00 : f32
    %99 = vector.shape_cast %95 : vector<8x1xi1> to vector<8x1xi1>
    %100 = vector.broadcast %99 : vector<8x1xi1> to vector<8x128xi1>
    %101 = vector.broadcast %cst_31 : f32 to vector<8x128xf32>
    %102 = arith.select %100, %98, %101 : vector<8x128xi1>, vector<8x128xf32>
    %103 = arith.index_cast %c1_i32 : i32 to index
    %c0_32 = arith.constant 0 : index
    %c0_33 = arith.constant 0 : index
    %104 = vector.load %arg9[%103, %c0_32, %c0_33] : memref<4x8x128xf32, #tpu.memory_space<vmem>>, vector<1x8x128xf32>
    %105 = vector.shape_cast %104 : vector<1x8x128xf32> to vector<8x128xf32>
    %106 = vector.shape_cast %102 : vector<8x128xf32> to vector<1x8x128xf32>
    tpu.vector_store %arg9[%103, %c0_32, %c0_33], %106 {strides = array<i32>} : memref<4x8x128xf32, #tpu.memory_space<vmem>>, vector<1x8x128xf32>,
    %107 = vector.shape_cast %95 : vector<8x1xi1> to vector<8x1xi1>
    %108 = vector.broadcast %107 : vector<8x1xi1> to vector<8x128xi1>
    %109 = arith.select %108, %92, %58 : vector<8x128xi1>, vector<8x128xf32>
    %110 = vector.shape_cast %95 : vector<8x1xi1> to vector<8x1xi1>
    %111 = vector.broadcast %110 : vector<8x1xi1> to vector<8x128xi1>
    %112 = arith.select %111, %90, %61 : vector<8x128xi1>, vector<8x128xf32>
    %c2_i32 = arith.constant 2 : i32
    %113 = arith.index_cast %c2_i32 : i32 to index
    %c0_34 = arith.constant 0 : index
    %c0_35 = arith.constant 0 : index
    %114 = vector.load %arg5[%113, %c0_34, %c0_35] : memref<4x8x128xf32, #tpu.memory_space<vmem>>, vector<1x8x128xf32>
    %115 = vector.shape_cast %114 : vector<1x8x128xf32> to vector<8x128xf32>
    %116 = tpu.concatenate %115, %109 in 1 : vector<8x128xf32>, vector<8x128xf32> -> vector<8x256xf32>
    %cst_36 = arith.constant dense<0.000000e+00> : vector<8x512xf32>
    %117 = tpu.matmul %116, %5, %cst_36 {dimension_numbers = #tpu.dot_dimension_numbers<[1], [0], [0], [1], [0, 0, 1, 1], [], []>} : vector<8x256xf32>, vector<256x512xf32>, vector<8x512xf32> -> vector<8x512xf32>
    %118 = arith.addf %117, %3 : vector<8x512xf32>
    %119 = vector.extract_strided_slice %118 {offsets = [0, 0], sizes = [8, 128], strides = [1, 1]} : vector<8x512xf32> to vector<8x128xf32>
    %120 = arith.negf %119 : vector<8x128xf32>
    %121 = math.exp %120 : vector<8x128xf32>
    %cst_37 = arith.constant 1.000000e+00 : f32
    %122 = vector.broadcast %cst_37 : f32 to vector<8x128xf32>
    %123 = arith.addf %122, %121 : vector<8x128xf32>
    %124 = arith.divf %122, %123 : vector<8x128xf32>
    %125 = vector.extract_strided_slice %118 {offsets = [0, 128], sizes = [8, 128], strides = [1, 1]} : vector<8x512xf32> to vector<8x128xf32>
    %126 = arith.negf %125 : vector<8x128xf32>
    %127 = math.exp %126 : vector<8x128xf32>
    %cst_38 = arith.constant 1.000000e+00 : f32
    %128 = vector.broadcast %cst_38 : f32 to vector<8x128xf32>
    %129 = arith.addf %128, %127 : vector<8x128xf32>
    %130 = arith.divf %128, %129 : vector<8x128xf32>
    %131 = vector.extract_strided_slice %118 {offsets = [0, 256], sizes = [8, 128], strides = [1, 1]} : vector<8x512xf32> to vector<8x128xf32>
    %132 = math.tanh %131 : vector<8x128xf32>
    %133 = vector.extract_strided_slice %118 {offsets = [0, 384], sizes = [8, 128], strides = [1, 1]} : vector<8x512xf32> to vector<8x128xf32>
    %134 = arith.negf %133 : vector<8x128xf32>
    %135 = math.exp %134 : vector<8x128xf32>
    %cst_39 = arith.constant 1.000000e+00 : f32
    %136 = vector.broadcast %cst_39 : f32 to vector<8x128xf32>
    %137 = arith.addf %136, %135 : vector<8x128xf32>
    %138 = arith.divf %136, %137 : vector<8x128xf32>
    %139 = arith.mulf %130, %112 : vector<8x128xf32>
    %140 = arith.mulf %124, %132 : vector<8x128xf32>
    %141 = arith.addf %139, %140 : vector<8x128xf32>
    %142 = math.tanh %141 : vector<8x128xf32>
    %143 = arith.mulf %138, %142 : vector<8x128xf32>
    %144 = arith.addi %8, %c2_i32 : i32
    %145 = vector.broadcast %144 : i32 to vector<8x1xi32>
    %146 = arith.cmpi sgt, %4, %145 : vector<8x1xi32>
    %cst_40 = arith.constant dense<0.000000e+00> : vector<8x128xf32>
    %147 = tpu.matmul %143, %6, %cst_40 {dimension_numbers = #tpu.dot_dimension_numbers<[1], [0], [0], [1], [0, 0, 1, 1], [], []>} : vector<8x128xf32>, vector<128x128xf32>, vector<8x128xf32> -> vector<8x128xf32>
    %148 = vector.broadcast %7 : vector<1x128xf32> to vector<8x128xf32>
    %149 = arith.addf %147, %148 : vector<8x128xf32>
    %cst_41 = arith.constant 0.000000e+00 : f32
    %150 = vector.shape_cast %146 : vector<8x1xi1> to vector<8x1xi1>
    %151 = vector.broadcast %150 : vector<8x1xi1> to vector<8x128xi1>
    %152 = vector.broadcast %cst_41 : f32 to vector<8x128xf32>
    %153 = arith.select %151, %149, %152 : vector<8x128xi1>, vector<8x128xf32>
    %154 = arith.index_cast %c2_i32 : i32 to index
    %c0_42 = arith.constant 0 : index
    %c0_43 = arith.constant 0 : index
    %155 = vector.load %arg9[%154, %c0_42, %c0_43] : memref<4x8x128xf32, #tpu.memory_space<vmem>>, vector<1x8x128xf32>
    %156 = vector.shape_cast %155 : vector<1x8x128xf32> to vector<8x128xf32>
    %157 = vector.shape_cast %153 : vector<8x128xf32> to vector<1x8x128xf32>
    tpu.vector_store %arg9[%154, %c0_42, %c0_43], %157 {strides = array<i32>} : memref<4x8x128xf32, #tpu.memory_space<vmem>>, vector<1x8x128xf32>,
    %158 = vector.shape_cast %146 : vector<8x1xi1> to vector<8x1xi1>
    %159 = vector.broadcast %158 : vector<8x1xi1> to vector<8x128xi1>
    %160 = arith.select %159, %143, %109 : vector<8x128xi1>, vector<8x128xf32>
    %161 = vector.shape_cast %146 : vector<8x1xi1> to vector<8x1xi1>
    %162 = vector.broadcast %161 : vector<8x1xi1> to vector<8x128xi1>
    %163 = arith.select %162, %141, %112 : vector<8x128xi1>, vector<8x128xf32>
    %c3_i32 = arith.constant 3 : i32
    %164 = arith.index_cast %c3_i32 : i32 to index
    %c0_44 = arith.constant 0 : index
    %c0_45 = arith.constant 0 : index
    %165 = vector.load %arg5[%164, %c0_44, %c0_45] : memref<4x8x128xf32, #tpu.memory_space<vmem>>, vector<1x8x128xf32>
    %166 = vector.shape_cast %165 : vector<1x8x128xf32> to vector<8x128xf32>
    %167 = tpu.concatenate %166, %160 in 1 : vector<8x128xf32>, vector<8x128xf32> -> vector<8x256xf32>
    %cst_46 = arith.constant dense<0.000000e+00> : vector<8x512xf32>
    %168 = tpu.matmul %167, %5, %cst_46 {dimension_numbers = #tpu.dot_dimension_numbers<[1], [0], [0], [1], [0, 0, 1, 1], [], []>} : vector<8x256xf32>, vector<256x512xf32>, vector<8x512xf32> -> vector<8x512xf32>
    %169 = arith.addf %168, %3 : vector<8x512xf32>
    %170 = vector.extract_strided_slice %169 {offsets = [0, 0], sizes = [8, 128], strides = [1, 1]} : vector<8x512xf32> to vector<8x128xf32>
    %171 = arith.negf %170 : vector<8x128xf32>
    %172 = math.exp %171 : vector<8x128xf32>
    %cst_47 = arith.constant 1.000000e+00 : f32
    %173 = vector.broadcast %cst_47 : f32 to vector<8x128xf32>
    %174 = arith.addf %173, %172 : vector<8x128xf32>
    %175 = arith.divf %173, %174 : vector<8x128xf32>
    %176 = vector.extract_strided_slice %169 {offsets = [0, 128], sizes = [8, 128], strides = [1, 1]} : vector<8x512xf32> to vector<8x128xf32>
    %177 = arith.negf %176 : vector<8x128xf32>
    %178 = math.exp %177 : vector<8x128xf32>
    %cst_48 = arith.constant 1.000000e+00 : f32
    %179 = vector.broadcast %cst_48 : f32 to vector<8x128xf32>
    %180 = arith.addf %179, %178 : vector<8x128xf32>
    %181 = arith.divf %179, %180 : vector<8x128xf32>
    %182 = vector.extract_strided_slice %169 {offsets = [0, 256], sizes = [8, 128], strides = [1, 1]} : vector<8x512xf32> to vector<8x128xf32>
    %183 = math.tanh %182 : vector<8x128xf32>
    %184 = vector.extract_strided_slice %169 {offsets = [0, 384], sizes = [8, 128], strides = [1, 1]} : vector<8x512xf32> to vector<8x128xf32>
    %185 = arith.negf %184 : vector<8x128xf32>
    %186 = math.exp %185 : vector<8x128xf32>
    %cst_49 = arith.constant 1.000000e+00 : f32
    %187 = vector.broadcast %cst_49 : f32 to vector<8x128xf32>
    %188 = arith.addf %187, %186 : vector<8x128xf32>
    %189 = arith.divf %187, %188 : vector<8x128xf32>
    %190 = arith.mulf %181, %163 : vector<8x128xf32>
    %191 = arith.mulf %175, %183 : vector<8x128xf32>
    %192 = arith.addf %190, %191 : vector<8x128xf32>
    %193 = math.tanh %192 : vector<8x128xf32>
    %194 = arith.mulf %189, %193 : vector<8x128xf32>
    %195 = arith.addi %8, %c3_i32 : i32
    %196 = vector.broadcast %195 : i32 to vector<8x1xi32>
    %197 = arith.cmpi sgt, %4, %196 : vector<8x1xi32>
    %cst_50 = arith.constant dense<0.000000e+00> : vector<8x128xf32>
    %198 = tpu.matmul %194, %6, %cst_50 {dimension_numbers = #tpu.dot_dimension_numbers<[1], [0], [0], [1], [0, 0, 1, 1], [], []>} : vector<8x128xf32>, vector<128x128xf32>, vector<8x128xf32> -> vector<8x128xf32>
    %199 = vector.broadcast %7 : vector<1x128xf32> to vector<8x128xf32>
    %200 = arith.addf %198, %199 : vector<8x128xf32>
    %cst_51 = arith.constant 0.000000e+00 : f32
    %201 = vector.shape_cast %197 : vector<8x1xi1> to vector<8x1xi1>
    %202 = vector.broadcast %201 : vector<8x1xi1> to vector<8x128xi1>
    %203 = vector.broadcast %cst_51 : f32 to vector<8x128xf32>
    %204 = arith.select %202, %200, %203 : vector<8x128xi1>, vector<8x128xf32>
    %205 = arith.index_cast %c3_i32 : i32 to index
    %c0_52 = arith.constant 0 : index
    %c0_53 = arith.constant 0 : index
    %206 = vector.load %arg9[%205, %c0_52, %c0_53] : memref<4x8x128xf32, #tpu.memory_space<vmem>>, vector<1x8x128xf32>
    %207 = vector.shape_cast %206 : vector<1x8x128xf32> to vector<8x128xf32>
    %208 = vector.shape_cast %204 : vector<8x128xf32> to vector<1x8x128xf32>
    tpu.vector_store %arg9[%205, %c0_52, %c0_53], %208 {strides = array<i32>} : memref<4x8x128xf32, #tpu.memory_space<vmem>>, vector<1x8x128xf32>,
    %209 = vector.shape_cast %197 : vector<8x1xi1> to vector<8x1xi1>
    %210 = vector.broadcast %209 : vector<8x1xi1> to vector<8x128xi1>
    %211 = arith.select %210, %194, %160 : vector<8x128xi1>, vector<8x128xf32>
    %212 = vector.shape_cast %197 : vector<8x1xi1> to vector<8x1xi1>
    %213 = vector.broadcast %212 : vector<8x1xi1> to vector<8x128xi1>
    %214 = arith.select %213, %192, %163 : vector<8x128xi1>, vector<8x128xf32>
    %c4_i32_54 = arith.constant 4 : i32
    %c0_55 = arith.constant 0 : index
    %c0_56 = arith.constant 0 : index
    %215 = vector.load %arg10[%c0_55, %c0_56] : memref<8x128xf32, #tpu.memory_space<vmem>>, vector<8x128xf32>
    tpu.vector_store %arg10[%c0_55, %c0_56], %211 {strides = array<i32>} : memref<8x128xf32, #tpu.memory_space<vmem>>, vector<8x128xf32>,
    %c0_57 = arith.constant 0 : index
    %c0_58 = arith.constant 0 : index
    %216 = vector.load %arg11[%c0_57, %c0_58] : memref<8x128xf32, #tpu.memory_space<vmem>>, vector<8x128xf32>
    tpu.vector_store %arg11[%c0_57, %c0_58], %214 {strides = array<i32>} : memref<8x128xf32, #tpu.memory_space<vmem>>, vector<8x128xf32>,
    return
  }
  func.func @transform_0(%arg0: i32) -> (i32, i32) {
    %c0_i32 = arith.constant 0 : i32
    %c0_i32_0 = arith.constant 0 : i32
    %c0_i32_1 = arith.constant 0 : i32
    return %c0_i32, %c0_i32_0 : i32, i32
  }
  func.func @transform_1(%arg0: i32) -> (i32, i32) {
    %c0_i32 = arith.constant 0 : i32
    %c0_i32_0 = arith.constant 0 : i32
    %c0_i32_1 = arith.constant 0 : i32
    return %c0_i32, %c0_i32_0 : i32, i32
  }
  func.func @transform_2(%arg0: i32) -> (i32, i32) {
    %c0_i32 = arith.constant 0 : i32
    %c0_i32_0 = arith.constant 0 : i32
    %c0_i32_1 = arith.constant 0 : i32
    return %c0_i32, %c0_i32_0 : i32, i32
  }
  func.func @transform_3(%arg0: i32) -> (i32, i32) {
    %c0_i32 = arith.constant 0 : i32
    %c0_i32_0 = arith.constant 0 : i32
    %c0_i32_1 = arith.constant 0 : i32
    return %c0_i32, %c0_i32_0 : i32, i32
  }
  func.func @transform_4(%arg0: i32) -> (i32, i32, i32) {
    %c0_i32 = arith.constant 0 : i32
    %c0_i32_0 = arith.constant 0 : i32
    %c0_i32_1 = arith.constant 0 : i32
    return %arg0, %c0_i32, %c0_i32_0 : i32, i32, i32
  }
  func.func @transform_5(%arg0: i32) -> (i32, i32) {
    %c0_i32 = arith.constant 0 : i32
    %c0_i32_0 = arith.constant 0 : i32
    %c0_i32_1 = arith.constant 0 : i32
    return %c0_i32, %c0_i32_0 : i32, i32
  }
  func.func @transform_6(%arg0: i32) -> (i32, i32) {
    %c0_i32 = arith.constant 0 : i32
    %c0_i32_0 = arith.constant 0 : i32
    %c0_i32_1 = arith.constant 0 : i32
    return %c0_i32, %c0_i32_0 : i32, i32
  }
  func.func @transform_7(%arg0: i32) -> (i32, i32) {
    %c0_i32 = arith.constant 0 : i32
    %c0_i32_0 = arith.constant 0 : i32
    %c0_i32_1 = arith.constant 0 : i32
    return %c0_i32, %c0_i32_0 : i32, i32
  }
  func.func @transform_8(%arg0: i32) -> (i32, i32, i32) {
    %c0_i32 = arith.constant 0 : i32
    %c0_i32_0 = arith.constant 0 : i32
    %c0_i32_1 = arith.constant 0 : i32
    return %arg0, %c0_i32, %c0_i32_0 : i32, i32, i32
  }
}

</mosaic_0001>

<llo_original>
// kernel: tpu_custom_call.1
$region0: #{tpu_custom_call.1}
  #allocation0 [shape = 'u32[]', space=smem, size = 0x4, offset = 0x4, fixed_abs, tag = 'smem constant byte address 0x4 - core index']
  #allocation1 [shape = 'u32[72,128]{1,0:T(1,128)}', space=vmem, size = 0x9000, scoped, tag = 'internal scratch']
  #allocation2 [shape = 'f32[8,128]{1,0:T(8,128)}', space=vmem, size = 0x1000, scoped, tag = 'scratch operand']
  #allocation3 [shape = 'f32[8,128]{1,0:T(8,128)}', space=vmem, size = 0x1000, scoped, tag = 'scratch operand']
  %s0 = inlined_call_operand.vmem [shape: s32[8,1], index: 0, kind: input, shape index: {}]
  %s1 = inlined_call_operand.vmem [shape: f32[8,128], index: 1, kind: input, shape index: {}]
  %s2 = inlined_call_operand.hbm [shape: f32[8,128], index: 2, kind: input, shape index: {}]
  %s3 = inlined_call_operand.hbm [shape: f32[8,512], index: 3, kind: input, shape index: {}]
  %s4 = inlined_call_operand.hbm [shape: f32[8,8,128], index: 4, kind: input, shape index: {}]
  %s5 = inlined_call_operand.hbm [shape: f32[256,512], index: 5, kind: input, shape index: {}]
  %s6 = inlined_call_operand.hbm [shape: f32[128,128], index: 6, kind: input, shape index: {}]
  %s7 = inlined_call_operand.vmem [shape: f32[1,128], index: 7, kind: input, shape index: {}]
  %s8 = inlined_call_operand.hbm [shape: f32[8,8,128], index: 8, kind: output, shape index: {}]
  %s9 = sld [smem:[#allocation0]]
  $region89: #{tpu_custom_call.1} parent=0
    _
  %s11 = ssub.s32 1, %s9
  %s12 = scalar_select 0, %s11, %s9
  $region1: #{tpu_custom_call.1} parent=0
    #allocation4 [shape = 'u8[4096]{0}', space=vmem, size = 0x1000, scoped, tag = 'input window, operand 2, single buffered']
    #allocation5 [shape = 's32[2]{0}', space=sflag, size = 0x8, scoped, tag = 'scoped memory for tpu_custom_call.1']
    #allocation6 [shape = 's32[2]{0}', space=sflag, size = 0x8, scoped, tag = 'scoped memory for tpu_custom_call.1']
    #allocation7 [shape = 'u8[16384]{0}', space=vmem, size = 0x4000, scoped, tag = 'input window, operand 3, single buffered']
    #allocation8 [shape = 's32[1]{0}', space=sflag, size = 0x4, scoped, tag = 'scoped memory for tpu_custom_call.1']
    #allocation9 [shape = 'u8[32768]{0}', space=vmem, size = 0x8000, scoped, tag = 'input window, operand 4']
    #allocation10 [shape = 'u8[524288]{0}', space=vmem, size = 0x80000, scoped, tag = 'input window, operand 5, single buffered']
    #allocation11 [shape = 'u8[65536]{0}', space=vmem, size = 0x10000, scoped, tag = 'input window, operand 6, single buffered']
    #allocation12 [shape = 's32[1]{0}', space=sflag, size = 0x4, scoped, tag = 'scoped memory for tpu_custom_call.1']
    #allocation13 [shape = 'u8[32768]{0}', space=vmem, size = 0x8000, scoped, tag = 'output window, operand 0']
    %13 = vsyncpa [#allocation5], 0
    %14 = vsyncpa [#allocation8], 0
    %15 = vsyncpa [#allocation12], 0
    %16 = vsyncpa [#allocation6], 0
    %s17 = scalar_lea.sflag [#allocation6], 1
    %18 = vsyncpa %s17, 0
    loop: start=0, step=1, limit=4
    $region2: #{tpu_custom_call.1} parent=1 // loop_pre_header
      _
    $region3: #{tpu_custom_call.1} parent=1 // loop_header
      %s20 = sphi 0, %s24
      %p21 = scmp.ge.s32.totalorder %s20, 4
      %s28 = sphi 0, %s28
      %s30 = sphi 0, %s28
      %s31 = sphi 0, %s30
      %s45 = sphi 0, %s31
      %s49 = sphi 0, %s49
      %s51 = sphi 0, %s49
      %s52 = sphi 0, %s51
      %s66 = sphi 0, %s52
      %s70 = sphi 0, %s70
      %s72 = sphi 0, %s70
      %s73 = sphi 0, %s72
      %s87 = sphi 0, %s73
      %s91 = sphi 0, %s91
      %s93 = sphi 0, %s91
      %s94 = sphi 0, %s93
      %s108 = sphi 0, %s94
      %s114 = sphi 0, %s116
      %s117 = sphi 0, %s114
      %s118 = sphi 0, %s117
      %s134 = sphi 0, %s118
      %s138 = sphi 0, %s138
      %s140 = sphi 0, %s138
      %s141 = sphi 0, %s140
      %s155 = sphi 0, %s141
      %s159 = sphi 0, %s159
      %s161 = sphi 0, %s159
      %s162 = sphi 0, %s161
      %s176 = sphi 0, %s162
      %s180 = sphi 0, %s180
      %s182 = sphi 0, %s180
      %s183 = sphi 0, %s182
      %s197 = sphi 0, %s183
      %s203 = sphi 0, %s205
      %s206 = sphi 0, %s203
      %s207 = sphi 0, %s206
      %s223 = sphi 0, %s207
    $region4: #{tpu_custom_call.1} parent=1 // loop_header_branch
      %23 = sbr.rel (%p21) target = $region8
    $region5: #{tpu_custom_call.1} parent=1 // loop_body
      %s25 = ssub.s32 %s20, 1
      %s26 = ssub.s32 %s20, 2
      %s27 = sadd.s32 %s20, 1
      %s29 = sadd.s32 %s28, 1
      %p32 = scmp.eq.s32.totalorder %s20, 1
      %p33 = scmp.ne.s32.totalorder %s28, %s30
      %p34 = scmp.eq.s32.totalorder %s20, 0
      %p35 = por %p33, %p34
      %p36 = scmp.ne.s32.totalorder %s28, %s30
      %p37 = scmp.eq.s32.totalorder %s25, 1
      %p38 = por %p36, %p37
      %p39 = scmp.ne.s32.totalorder %s30, %s31
      %p40 = scmp.eq.s32.totalorder %s25, 0
      %p41 = por %p39, %p40
      %p42 = scmp.ne.s32.totalorder %s30, %s31
      %p43 = scmp.eq.s32.totalorder %s26, 1
      %p44 = por %p42, %p43
      %p46 = scmp.ne.s32.totalorder %s31, %s45
      %p47 = scmp.eq.s32.totalorder %s26, 0
      %p48 = por %p46, %p47
      %s50 = sadd.s32 %s49, 1
      %p53 = scmp.eq.s32.totalorder %s20, 1
      %p54 = scmp.ne.s32.totalorder %s49, %s51
      %p55 = scmp.eq.s32.totalorder %s20, 0
      %p56 = por %p54, %p55
      %p57 = scmp.ne.s32.totalorder %s49, %s51
      %p58 = scmp.eq.s32.totalorder %s25, 1
      %p59 = por %p57, %p58
      %p60 = scmp.ne.s32.totalorder %s51, %s52
      %p61 = scmp.eq.s32.totalorder %s25, 0
      %p62 = por %p60, %p61
      %p63 = scmp.ne.s32.totalorder %s51, %s52
      %p64 = scmp.eq.s32.totalorder %s26, 1
      %p65 = por %p63, %p64
      %p67 = scmp.ne.s32.totalorder %s52, %s66
      %p68 = scmp.eq.s32.totalorder %s26, 0
      %p69 = por %p67, %p68
      %s71 = sadd.s32 %s70, 1
      %p74 = scmp.eq.s32.totalorder %s20, 1
      %p75 = scmp.ne.s32.totalorder %s70, %s72
      %p76 = scmp.eq.s32.totalorder %s20, 0
      %p77 = por %p75, %p76
      %p78 = scmp.ne.s32.totalorder %s70, %s72
      %p79 = scmp.eq.s32.totalorder %s25, 1
      %p80 = por %p78, %p79
      %p81 = scmp.ne.s32.totalorder %s72, %s73
      %p82 = scmp.eq.s32.totalorder %s25, 0
      %p83 = por %p81, %p82
      %p84 = scmp.ne.s32.totalorder %s72, %s73
      %p85 = scmp.eq.s32.totalorder %s26, 1
      %p86 = por %p84, %p85
      %p88 = scmp.ne.s32.totalorder %s73, %s87
      %p89 = scmp.eq.s32.totalorder %s26, 0
      %p90 = por %p88, %p89
      %s92 = sadd.s32 %s91, 1
      %p95 = scmp.eq.s32.totalorder %s20, 1
      %p96 = scmp.ne.s32.totalorder %s91, %s93
      %p97 = scmp.eq.s32.totalorder %s20, 0
      %p98 = por %p96, %p97
      %p99 = scmp.ne.s32.totalorder %s91, %s93
      %p100 = scmp.eq.s32.totalorder %s25, 1
      %p101 = por %p99, %p100
      %p102 = scmp.ne.s32.totalorder %s93, %s94
      %p103 = scmp.eq.s32.totalorder %s25, 0
      %p104 = por %p102, %p103
      %p105 = scmp.ne.s32.totalorder %s93, %s94
      %p106 = scmp.eq.s32.totalorder %s26, 1
      %p107 = por %p105, %p106
      %p109 = scmp.ne.s32.totalorder %s94, %s108
      %p110 = scmp.eq.s32.totalorder %s26, 0
      %p111 = por %p109, %p110
      %s112 = ssub.s32 %s20, %s27
      %p113 = scmp.eq.s32.totalorder %s112, 0
      %s115 = sadd.s32 %s114, 1
      %s116 = scalar_select %p113, %s114, %s115
      %p119 = pneg %p113
      %p120 = scmp.eq.s32.totalorder %s20, 1
      %p121 = por %p119, %p120
      %p122 = scmp.ne.s32.totalorder %s114, %s117
      %p123 = scmp.eq.s32.totalorder %s20, 0
      %p124 = por %p122, %p123
      %p125 = scmp.ne.s32.totalorder %s114, %s117
      %p126 = scmp.eq.s32.totalorder %s25, 1
      %p127 = por %p125, %p126
      %p128 = scmp.ne.s32.totalorder %s117, %s118
      %p129 = scmp.eq.s32.totalorder %s25, 0
      %p130 = por %p128, %p129
      %p131 = scmp.ne.s32.totalorder %s117, %s118
      %p132 = scmp.eq.s32.totalorder %s26, 1
      %p133 = por %p131, %p132
      %p135 = scmp.ne.s32.totalorder %s118, %s134
      %p136 = scmp.eq.s32.totalorder %s26, 0
      %p137 = por %p135, %p136
      %s139 = sadd.s32 %s138, 1
      %p142 = scmp.eq.s32.totalorder %s20, 1
      %p143 = scmp.ne.s32.totalorder %s138, %s140
      %p144 = scmp.eq.s32.totalorder %s20, 0
      %p145 = por %p143, %p144
      %p146 = scmp.ne.s32.totalorder %s138, %s140
      %p147 = scmp.eq.s32.totalorder %s25, 1
      %p148 = por %p146, %p147
      %p149 = scmp.ne.s32.totalorder %s140, %s141
      %p150 = scmp.eq.s32.totalorder %s25, 0
      %p151 = por %p149, %p150
      %p152 = scmp.ne.s32.totalorder %s140, %s141
      %p153 = scmp.eq.s32.totalorder %s26, 1
      %p154 = por %p152, %p153
      %p156 = scmp.ne.s32.totalorder %s141, %s155
      %p157 = scmp.eq.s32.totalorder %s26, 0
      %p158 = por %p156, %p157
      %s160 = sadd.s32 %s159, 1
      %p163 = scmp.eq.s32.totalorder %s20, 1
      %p164 = scmp.ne.s32.totalorder %s159, %s161
      %p165 = scmp.eq.s32.totalorder %s20, 0
      %p166 = por %p164, %p165
      %p167 = scmp.ne.s32.totalorder %s159, %s161
      %p168 = scmp.eq.s32.totalorder %s25, 1
      %p169 = por %p167, %p168
      %p170 = scmp.ne.s32.totalorder %s161, %s162
      %p171 = scmp.eq.s32.totalorder %s25, 0
      %p172 = por %p170, %p171
      %p173 = scmp.ne.s32.totalorder %s161, %s162
      %p174 = scmp.eq.s32.totalorder %s26, 1
      %p175 = por %p173, %p174
      %p177 = scmp.ne.s32.totalorder %s162, %s176
      %p178 = scmp.eq.s32.totalorder %s26, 0
      %p179 = por %p177, %p178
      %s181 = sadd.s32 %s180, 1
      %p184 = scmp.eq.s32.totalorder %s20, 1
      %p185 = scmp.ne.s32.totalorder %s180, %s182
      %p186 = scmp.eq.s32.totalorder %s20, 0
      %p187 = por %p185, %p186
      %p188 = scmp.ne.s32.totalorder %s180, %s182
      %p189 = scmp.eq.s32.totalorder %s25, 1
      %p190 = por %p188, %p189
      %p191 = scmp.ne.s32.totalorder %s182, %s183
      %p192 = scmp.eq.s32.totalorder %s25, 0
      %p193 = por %p191, %p192
      %p194 = scmp.ne.s32.totalorder %s182, %s183
      %p195 = scmp.eq.s32.totalorder %s26, 1
      %p196 = por %p194, %p195
      %p198 = scmp.ne.s32.totalorder %s183, %s197
      %p199 = scmp.eq.s32.totalorder %s26, 0
      %p200 = por %p198, %p199
      %s201 = ssub.s32 %s20, %s27
      %p202 = scmp.eq.s32.totalorder %s201, 0
      %s204 = sadd.s32 %s203, 1
      %s205 = scalar_select %p202, %s203, %s204
      %p208 = pneg %p202
      %p209 = scmp.eq.s32.totalorder %s20, 1
      %p210 = por %p208, %p209
      %p211 = scmp.ne.s32.totalorder %s203, %s206
      %p212 = scmp.eq.s32.totalorder %s20, 0
      %p213 = por %p211, %p212
      %p214 = scmp.ne.s32.totalorder %s203, %s206
      %p215 = scmp.eq.s32.totalorder %s25, 1
      %p216 = por %p214, %p215
      %p217 = scmp.ne.s32.totalorder %s206, %s207
      %p218 = scmp.eq.s32.totalorder %s25, 0
      %p219 = por %p217, %p218
      %p220 = scmp.ne.s32.totalorder %s206, %s207
      %p221 = scmp.eq.s32.totalorder %s26, 1
      %p222 = por %p220, %p221
      %p224 = scmp.ne.s32.totalorder %s207, %s223
      %p225 = scmp.eq.s32.totalorder %s26, 0
      %p226 = por %p224, %p225
      %p227 = scmp.le.s32.totalorder 1, %s20
      %p228 = scmp.lt.s32.totalorder %s20, 3
      %p229 = pnand %p227, %p228
      %p230 = pneg %p229
      // Predicated region
      $region9: #{tpu_custom_call.1} parent=5 // pred_check
        _
      $region10: #{tpu_custom_call.1} parent=5 // pred_check_branch
        %232 = sbr.rel (%p229) target = $region12
      $region11: #{tpu_custom_call.1} parent=5 // pred_region
        %s233 = ssub.s32 %s20, 1
        // Predicated region
        $region13: #{tpu_custom_call.1} parent=11 // pred_check
          %p234 = pneg %p41
        $region14: #{tpu_custom_call.1} parent=11 // pred_check_branch
          %236 = sbr.rel (%p234) target = $region16
        $region15: #{tpu_custom_call.1} parent=11 // pred_region
          _
        $region16: #{tpu_custom_call.1} parent=11 // pred_fallthru
          _
        // Predicated region
        $region17: #{tpu_custom_call.1} parent=11 // pred_check
          %p237 = pneg %p62
        $region18: #{tpu_custom_call.1} parent=11 // pred_check_branch
          %239 = sbr.rel (%p237) target = $region20
        $region19: #{tpu_custom_call.1} parent=11 // pred_region
          _
        $region20: #{tpu_custom_call.1} parent=11 // pred_fallthru
          _
        // Predicated region
        $region21: #{tpu_custom_call.1} parent=11 // pred_check
          %p240 = pneg %p83
        $region22: #{tpu_custom_call.1} parent=11 // pred_check_branch
          %242 = sbr.rel (%p240) target = $region24
        $region23: #{tpu_custom_call.1} parent=11 // pred_region
          %244 = vsyncadd [#allocation5], 0
          %s246 = sshll.u32 %s2, 4
          %s247 = int_to_ptr.hbm [resolvable:$true] %s246
          %s248 = sshll.u32 [#allocation4], 4
          %s249 = int_to_ptr.vmem [resolvable:$true] %s248
          %251 = dma.hbm_to_vmem [thread:$0]  %s247, 128, %s249, [#allocation5]
        $region24: #{tpu_custom_call.1} parent=11 // pred_fallthru
          _
        // Predicated region
        $region25: #{tpu_custom_call.1} parent=11 // pred_check
          %p252 = pneg %p104
        $region26: #{tpu_custom_call.1} parent=11 // pred_check_branch
          %254 = sbr.rel (%p252) target = $region28
        $region27: #{tpu_custom_call.1} parent=11 // pred_region
          %256 = vsyncadd [#allocation8], 0
          %s258 = sshll.u32 %s3, 4
          %s259 = int_to_ptr.hbm [resolvable:$true] %s258
          %s260 = sshll.u32 [#allocation7], 4
          %s261 = int_to_ptr.vmem [resolvable:$true] %s260
          %263 = dma.hbm_to_vmem [thread:$0]  %s259, 512, %s261, [#allocation8]
        $region28: #{tpu_custom_call.1} parent=11 // pred_fallthru
          _
        // Predicated region
        $region29: #{tpu_custom_call.1} parent=11 // pred_check
          %p264 = pneg %p151
        $region30: #{tpu_custom_call.1} parent=11 // pred_check_branch
          %266 = sbr.rel (%p264) target = $region32
        $region31: #{tpu_custom_call.1} parent=11 // pred_region
          %268 = vsyncadd [#allocation8], 0
          %s269 = sshll.u32 %s5, 4
          %s270 = int_to_ptr.hbm [resolvable:$true] %s269
          %s271 = sshll.u32 [#allocation10], 4
          %s272 = int_to_ptr.vmem [resolvable:$true] %s271
          %277 = dma.hbm_to_vmem [thread:$0]  %s270, 16384, %s272, [#allocation8], 512, 512, 32
        $region32: #{tpu_custom_call.1} parent=11 // pred_fallthru
          _
        // Predicated region
        $region33: #{tpu_custom_call.1} parent=11 // pred_check
          %p278 = pneg %p172
        $region34: #{tpu_custom_call.1} parent=11 // pred_check_branch
          %280 = sbr.rel (%p278) target = $region36
        $region35: #{tpu_custom_call.1} parent=11 // pred_region
          %282 = vsyncadd [#allocation12], 0
          %s283 = sshll.u32 %s6, 4
          %s284 = int_to_ptr.hbm [resolvable:$true] %s283
          %s285 = sshll.u32 [#allocation11], 4
          %s286 = int_to_ptr.vmem [resolvable:$true] %s285
          %291 = dma.hbm_to_vmem [thread:$0]  %s284, 2048, %s286, [#allocation12], 128, 128, 8
        $region36: #{tpu_custom_call.1} parent=11 // pred_fallthru
          _
        // Predicated region
        $region37: #{tpu_custom_call.1} parent=11 // pred_check
          %p292 = pneg %p193
        $region38: #{tpu_custom_call.1} parent=11 // pred_check_branch
          %294 = sbr.rel (%p292) target = $region40
        $region39: #{tpu_custom_call.1} parent=11 // pred_region
          _
        $region40: #{tpu_custom_call.1} parent=11 // pred_fallthru
          _
      $region12: #{tpu_custom_call.1} parent=5 // pred_fallthru
        _
      %p295 = scmp.lt.s32.totalorder %s20, 2
      // Predicated region
      $region41: #{tpu_custom_call.1} parent=5 // pred_check
        %p296 = pneg %p295
      $region42: #{tpu_custom_call.1} parent=5 // pred_check_branch
        %298 = sbr.rel (%p296) target = $region44
      $region43: #{tpu_custom_call.1} parent=5 // pred_region
        // Predicated region
        $region45: #{tpu_custom_call.1} parent=43 // pred_check
          %p299 = pneg %p124
        $region46: #{tpu_custom_call.1} parent=43 // pred_check_branch
          %301 = sbr.rel (%p299) target = $region48
        $region47: #{tpu_custom_call.1} parent=43 // pred_region
          %s302 = sand.u32 %s20, 1
          %s303 = scalar_lea.sflag [#allocation5], %s302
          %s304 = sand.u32 %s114, 1
          %s305 = smul.addr %s304, 32
          %s306 = scalar_lea.vmem [#allocation9], %s305
          %s307 = smul.u32 4, %s20
          %309 = vsyncadd %s303, 0
          %s310 = smul.addr %s307, 8
          %s311 = scalar_lea.hbm %s4, %s310
          %s312 = sshll.u32 %s311, 4
          %s313 = int_to_ptr.hbm [resolvable:$true] %s312
          %s314 = sshll.u32 %s306, 4
          %s315 = int_to_ptr.vmem [resolvable:$true] %s314
          %320 = dma.hbm_to_vmem [thread:$0]  %s313, 512, %s315, %s303, 128, 128, 8
        $region48: #{tpu_custom_call.1} parent=43 // pred_fallthru
          _
      $region44: #{tpu_custom_call.1} parent=5 // pred_fallthru
        _
      %p321 = scmp.le.s32.totalorder 1, %s20
      %p322 = scmp.lt.s32.totalorder %s20, 3
      %p323 = pnand %p321, %p322
      %p324 = pneg %p323
      // Predicated region
      $region49: #{tpu_custom_call.1} parent=5 // pred_check
        _
      $region50: #{tpu_custom_call.1} parent=5 // pred_check_branch
        %326 = sbr.rel (%p323) target = $region52
      $region51: #{tpu_custom_call.1} parent=5 // pred_region
        %s327 = ssub.s32 %s20, 1
        // Predicated region
        $region53: #{tpu_custom_call.1} parent=51 // pred_check
          %p328 = pneg %p83
        $region54: #{tpu_custom_call.1} parent=51 // pred_check_branch
          %330 = sbr.rel (%p328) target = $region56
        $region55: #{tpu_custom_call.1} parent=51 // pred_region
          %332 = dma.done [#allocation5], 128
        $region56: #{tpu_custom_call.1} parent=51 // pred_fallthru
          _
        // Predicated region
        $region57: #{tpu_custom_call.1} parent=51 // pred_check
          %p333 = pneg %p104
        $region58: #{tpu_custom_call.1} parent=51 // pred_check_branch
          %335 = sbr.rel (%p333) target = $region60
        $region59: #{tpu_custom_call.1} parent=51 // pred_region
          %337 = dma.done [#allocation8], 512
        $region60: #{tpu_custom_call.1} parent=51 // pred_fallthru
          _
        %s338 = sand.u32 %s25, 1
        %s339 = scalar_lea.sflag [#allocation5], %s338
        %s340 = sand.u32 %s117, 1
        %s341 = smul.addr %s340, 32
        %s342 = scalar_lea.vmem [#allocation9], %s341
        // Predicated region
        $region61: #{tpu_custom_call.1} parent=51 // pred_check
          %p343 = pneg %p130
        $region62: #{tpu_custom_call.1} parent=51 // pred_check_branch
          %345 = sbr.rel (%p343) target = $region64
        $region63: #{tpu_custom_call.1} parent=51 // pred_region
          %347 = dma.done %s339, 512
        $region64: #{tpu_custom_call.1} parent=51 // pred_fallthru
          _
        // Predicated region
        $region65: #{tpu_custom_call.1} parent=51 // pred_check
          %p348 = pneg %p151
        $region66: #{tpu_custom_call.1} parent=51 // pred_check_branch
          %350 = sbr.rel (%p348) target = $region68
        $region67: #{tpu_custom_call.1} parent=51 // pred_region
          %352 = dma.done [#allocation8], 16384
        $region68: #{tpu_custom_call.1} parent=51 // pred_fallthru
          _
        // Predicated region
        $region69: #{tpu_custom_call.1} parent=51 // pred_check
          %p353 = pneg %p172
        $region70: #{tpu_custom_call.1} parent=51 // pred_check_branch
          %355 = sbr.rel (%p353) target = $region72
        $region71: #{tpu_custom_call.1} parent=51 // pred_region
          %357 = dma.done [#allocation12], 2048
        $region72: #{tpu_custom_call.1} parent=51 // pred_fallthru
          _
        %p358 = pneg %p41
        %p359 = pneg %p38
        %p360 = pneg %p62
        %p361 = pneg %p59
        %p362 = pneg %p83
        %p363 = pneg %p80
        %p364 = pneg %p104
        %p365 = pneg %p101
        %s366 = sand.u32 %s25, 1
        %s367 = scalar_lea.sflag [#allocation5], %s366
        %s368 = sand.u32 %s117, 1
        %s369 = smul.addr %s368, 32
        %s370 = scalar_lea.vmem [#allocation9], %s369
        %p371 = pneg %p130
        %p372 = pneg %p127
        %p373 = pneg %p151
        %p374 = pneg %p148
        %p375 = pneg %p172
        %p376 = pneg %p169
        %p377 = pneg %p193
        %p378 = pneg %p190
        %p379 = pneg %p219
        %p380 = pneg %p216
        %s381 = sand.u32 %s206, 1
        %s382 = scalar_lea.sflag [#allocation6], %s381
        %s383 = sand.u32 %s206, 1
        %s384 = smul.addr %s383, 32
        %s385 = scalar_lea.vmem [#allocation13], %s384
        %s386 = smul.u32 4, %s25
        %s387 = smul.u32 4, %s25
        %p388 = scmp.eq.s32.totalorder %s25, 0
        // Predicated region
        $region73: #{tpu_custom_call.1} parent=51 // pred_check
          %p389 = pneg %p388
        $region74: #{tpu_custom_call.1} parent=51 // pred_check_branch
          %391 = sbr.rel (%p389) target = $region76
        $region75: #{tpu_custom_call.1} parent=51 // pred_region
          %v392 = vld [vmem:[%s1] sm:$0xff]
          %393 = vst [vmem:[#allocation2] sm:$0xff] %v392
          %v394 = vld [vmem:[#allocation4] sm:$0xff]
          %395 = vst [vmem:[#allocation3] sm:$0xff] %v394
        $region76: #{tpu_custom_call.1} parent=51 // pred_fallthru
          _
        %v396 = vld [vmem:[#allocation7] sm:$0xff]
        %v397 = vld [vmem:[#allocation7 + $0x8] sm:$0xff]
        %v398 = vld [vmem:[#allocation7 + $0x10] sm:$0xff]
        %v399 = vld [vmem:[#allocation7 + $0x18] sm:$0xff]
        %v400 = vld [vmem:[%s0] sm:$0xff]
        %v401 = vld [vmem:[#allocation10] sm:$0xff]
        %v402 = vld [vmem:[#allocation10 + $0x8] sm:$0xff]
        %v403 = vld [vmem:[#allocation10 + $0x10] sm:$0xff]
        %v404 = vld [vmem:[#allocation10 + $0x18] sm:$0xff]
        %v405 = vld [vmem:[#allocation10 + $0x20] sm:$0xff]
        %v406 = vld [vmem:[#allocation10 + $0x28] sm:$0xff]
        %v407 = vld [vmem:[#allocation10 + $0x30] sm:$0xff]
        %v408 = vld [vmem:[#allocation10 + $0x38] sm:$0xff]
        %v409 = vld [vmem:[#allocation10 + $0x40] sm:$0xff]
        %v410 = vld [vmem:[#allocation10 + $0x48] sm:$0xff]
        %v411 = vld [vmem:[#allocation10 + $0x50] sm:$0xff]
        %v412 = vld [vmem:[#allocation10 + $0x58] sm:$0xff]
        %v413 = vld [vmem:[#allocation10 + $0x60] sm:$0xff]
        %v414 = vld [vmem:[#allocation10 + $0x68] sm:$0xff]
        %v415 = vld [vmem:[#allocation10 + $0x70] sm:$0xff]
        %v416 = vld [vmem:[#allocation10 + $0x78] sm:$0xff]
        %v417 = vld [vmem:[#allocation10 + $0x80] sm:$0xff]
        %v418 = vld [vmem:[#allocation10 + $0x88] sm:$0xff]
        %v419 = vld [vmem:[#allocation10 + $0x90] sm:$0xff]
        %v420 = vld [vmem:[#allocation10 + $0x98] sm:$0xff]
        %v421 = vld [vmem:[#allocation10 + $0xa0] sm:$0xff]
        %v422 = vld [vmem:[#allocation10 + $0xa8] sm:$0xff]
        %v423 = vld [vmem:[#allocation10 + $0xb0] sm:$0xff]
        %v424 = vld [vmem:[#allocation10 + $0xb8] sm:$0xff]
        %v425 = vld [vmem:[#allocation10 + $0xc0] sm:$0xff]
        %v426 = vld [vmem:[#allocation10 + $0xc8] sm:$0xff]
        %v427 = vld [vmem:[#allocation10 + $0xd0] sm:$0xff]
        %v428 = vld [vmem:[#allocation10 + $0xd8] sm:$0xff]
        %v429 = vld [vmem:[#allocation10 + $0xe0] sm:$0xff]
        %v430 = vld [vmem:[#allocation10 + $0xe8] sm:$0xff]
        %v431 = vld [vmem:[#allocation10 + $0xf0] sm:$0xff]
        %v432 = vld [vmem:[#allocation10 + $0xf8] sm:$0xff]
        %v433 = vld [vmem:[#allocation10 + $0x100] sm:$0xff]
        %v434 = vld [vmem:[#allocation10 + $0x108] sm:$0xff]
        %v435 = vld [vmem:[#allocation10 + $0x110] sm:$0xff]
        %v436 = vld [vmem:[#allocation10 + $0x118] sm:$0xff]
        %v437 = vld [vmem:[#allocation10 + $0x120] sm:$0xff]
        %v438 = vld [vmem:[#allocation10 + $0x128] sm:$0xff]
        %v439 = vld [vmem:[#allocation10 + $0x130] sm:$0xff]
        %v440 = vld [vmem:[#allocation10 + $0x138] sm:$0xff]
        %v441 = vld [vmem:[#allocation10 + $0x140] sm:$0xff]
        %v442 = vld [vmem:[#allocation10 + $0x148] sm:$0xff]
        %v443 = vld [vmem:[#allocation10 + $0x150] sm:$0xff]
        %v444 = vld [vmem:[#allocation10 + $0x158] sm:$0xff]
        %v445 = vld [vmem:[#allocation10 + $0x160] sm:$0xff]
        %v446 = vld [vmem:[#allocation10 + $0x168] sm:$0xff]
        %v447 = vld [vmem:[#allocation10 + $0x170] sm:$0xff]
        %v448 = vld [vmem:[#allocation10 + $0x178] sm:$0xff]
        %v449 = vld [vmem:[#allocation10 + $0x180] sm:$0xff]
        %v450 = vld [vmem:[#allocation10 + $0x188] sm:$0xff]
        %v451 = vld [vmem:[#allocation10 + $0x190] sm:$0xff]
        %v452 = vld [vmem:[#allocation10 + $0x198] sm:$0xff]
        %v453 = vld [vmem:[#allocation10 + $0x1a0] sm:$0xff]
        %v454 = vld [vmem:[#allocation10 + $0x1a8] sm:$0xff]
        %v455 = vld [vmem:[#allocation10 + $0x1b0] sm:$0xff]
        %v456 = vld [vmem:[#allocation10 + $0x1b8] sm:$0xff]
        %v457 = vld [vmem:[#allocation10 + $0x1c0] sm:$0xff]
        %v458 = vld [vmem:[#allocation10 + $0x1c8] sm:$0xff]
        %v459 = vld [vmem:[#allocation10 + $0x1d0] sm:$0xff]
        %v460 = vld [vmem:[#allocation10 + $0x1d8] sm:$0xff]
        %v461 = vld [vmem:[#allocation10 + $0x1e0] sm:$0xff]
        %v462 = vld [vmem:[#allocation10 + $0x1e8] sm:$0xff]
        %v463 = vld [vmem:[#allocation10 + $0x1f0] sm:$0xff]
        %v464 = vld [vmem:[#allocation10 + $0x1f8] sm:$0xff]
        %v465 = vld [vmem:[#allocation10 + $0x200] sm:$0xff]
        %v466 = vld [vmem:[#allocation10 + $0x208] sm:$0xff]
        %v467 = vld [vmem:[#allocation10 + $0x210] sm:$0xff]
        %v468 = vld [vmem:[#allocation10 + $0x218] sm:$0xff]
        %v469 = vld [vmem:[#allocation10 + $0x220] sm:$0xff]
        %v470 = vld [vmem:[#allocation10 + $0x228] sm:$0xff]
        %v471 = vld [vmem:[#allocation10 + $0x230] sm:$0xff]
        %v472 = vld [vmem:[#allocation10 + $0x238] sm:$0xff]
        %v473 = vld [vmem:[#allocation10 + $0x240] sm:$0xff]
        %v474 = vld [vmem:[#allocation10 + $0x248] sm:$0xff]
        %v475 = vld [vmem:[#allocation10 + $0x250] sm:$0xff]
        %v476 = vld [vmem:[#allocation10 + $0x258] sm:$0xff]
        %v477 = vld [vmem:[#allocation10 + $0x260] sm:$0xff]
        %v478 = vld [vmem:[#allocation10 + $0x268] sm:$0xff]
        %v479 = vld [vmem:[#allocation10 + $0x270] sm:$0xff]
        %v480 = vld [vmem:[#allocation10 + $0x278] sm:$0xff]
        %v481 = vld [vmem:[#allocation10 + $0x280] sm:$0xff]
        %v482 = vld [vmem:[#allocation10 + $0x288] sm:$0xff]
        %v483 = vld [vmem:[#allocation10 + $0x290] sm:$0xff]
        %v484 = vld [vmem:[#allocation10 + $0x298] sm:$0xff]
        %v485 = vld [vmem:[#allocation10 + $0x2a0] sm:$0xff]
        %v486 = vld [vmem:[#allocation10 + $0x2a8] sm:$0xff]
        %v487 = vld [vmem:[#allocation10 + $0x2b0] sm:$0xff]
        %v488 = vld [vmem:[#allocation10 + $0x2b8] sm:$0xff]
        %v489 = vld [vmem:[#allocation10 + $0x2c0] sm:$0xff]
        %v490 = vld [vmem:[#allocation10 + $0x2c8] sm:$0xff]
        %v491 = vld [vmem:[#allocation10 + $0x2d0] sm:$0xff]
        %v492 = vld [vmem:[#allocation10 + $0x2d8] sm:$0xff]
        %v493 = vld [vmem:[#allocation10 + $0x2e0] sm:$0xff]
        %v494 = vld [vmem:[#allocation10 + $0x2e8] sm:$0xff]
        %v495 = vld [vmem:[#allocation10 + $0x2f0] sm:$0xff]
        %v496 = vld [vmem:[#allocation10 + $0x2f8] sm:$0xff]
        %v497 = vld [vmem:[#allocation10 + $0x300] sm:$0xff]
        %v498 = vld [vmem:[#allocation10 + $0x308] sm:$0xff]
        %v499 = vld [vmem:[#allocation10 + $0x310] sm:$0xff]
        %v500 = vld [vmem:[#allocation10 + $0x318] sm:$0xff]
        %v501 = vld [vmem:[#allocation10 + $0x320] sm:$0xff]
        %v502 = vld [vmem:[#allocation10 + $0x328] sm:$0xff]
        %v503 = vld [vmem:[#allocation10 + $0x330] sm:$0xff]
        %v504 = vld [vmem:[#allocation10 + $0x338] sm:$0xff]
        %v505 = vld [vmem:[#allocation10 + $0x340] sm:$0xff]
        %v506 = vld [vmem:[#allocation10 + $0x348] sm:$0xff]
        %v507 = vld [vmem:[#allocation10 + $0x350] sm:$0xff]
        %v508 = vld [vmem:[#allocation10 + $0x358] sm:$0xff]
        %v509 = vld [vmem:[#allocation10 + $0x360] sm:$0xff]
        %v510 = vld [vmem:[#allocation10 + $0x368] sm:$0xff]
        %v511 = vld [vmem:[#allocation10 + $0x370] sm:$0xff]
        %v512 = vld [vmem:[#allocation10 + $0x378] sm:$0xff]
        %v513 = vld [vmem:[#allocation10 + $0x380] sm:$0xff]
        %v514 = vld [vmem:[#allocation10 + $0x388] sm:$0xff]
        %v515 = vld [vmem:[#allocation10 + $0x390] sm:$0xff]
        %v516 = vld [vmem:[#allocation10 + $0x398] sm:$0xff]
        %v517 = vld [vmem:[#allocation10 + $0x3a0] sm:$0xff]
        %v518 = vld [vmem:[#allocation10 + $0x3a8] sm:$0xff]
        %v519 = vld [vmem:[#allocation10 + $0x3b0] sm:$0xff]
        %v520 = vld [vmem:[#allocation10 + $0x3b8] sm:$0xff]
        %v521 = vld [vmem:[#allocation10 + $0x3c0] sm:$0xff]
        %v522 = vld [vmem:[#allocation10 + $0x3c8] sm:$0xff]
        %v523 = vld [vmem:[#allocation10 + $0x3d0] sm:$0xff]
        %v524 = vld [vmem:[#allocation10 + $0x3d8] sm:$0xff]
        %v525 = vld [vmem:[#allocation10 + $0x3e0] sm:$0xff]
        %v526 = vld [vmem:[#allocation10 + $0x3e8] sm:$0xff]
        %v527 = vld [vmem:[#allocation10 + $0x3f0] sm:$0xff]
        %v528 = vld [vmem:[#allocation10 + $0x3f8] sm:$0xff]
        %v529 = vld [vmem:[#allocation11] sm:$0xff]
        %v530 = vld [vmem:[#allocation11 + $0x8] sm:$0xff]
        %v531 = vld [vmem:[#allocation11 + $0x10] sm:$0xff]
        %v532 = vld [vmem:[#allocation11 + $0x18] sm:$0xff]
        %v533 = vld [vmem:[#allocation11 + $0x20] sm:$0xff]
        %v534 = vld [vmem:[#allocation11 + $0x28] sm:$0xff]
        %v535 = vld [vmem:[#allocation11 + $0x30] sm:$0xff]
        %v536 = vld [vmem:[#allocation11 + $0x38] sm:$0xff]
        %v537 = vld [vmem:[#allocation11 + $0x40] sm:$0xff]
        %v538 = vld [vmem:[#allocation11 + $0x48] sm:$0xff]
        %v539 = vld [vmem:[#allocation11 + $0x50] sm:$0xff]
        %v540 = vld [vmem:[#allocation11 + $0x58] sm:$0xff]
        %v541 = vld [vmem:[#allocation11 + $0x60] sm:$0xff]
        %v542 = vld [vmem:[#allocation11 + $0x68] sm:$0xff]
        %v543 = vld [vmem:[#allocation11 + $0x70] sm:$0xff]
        %v544 = vld [vmem:[#allocation11 + $0x78] sm:$0xff]
        %v545 = vld [vmem:[%s7] sm:$0x1]
        %s546 = smul.u32 %s25, 4
        %v547 = vld [vmem:[#allocation2] sm:$0xff]
        %v548 = vld [vmem:[#allocation3] sm:$0xff]
        %v549 = vld [vmem:[%s342] sm:$0xff]
        %550 = vmatpush.msra.mxu0 %v461
        %551 = vmatpush.msra.mxu0 %v457
        %552 = vmatpush.msra.mxu0 %v453
        %553 = vmatpush.msra.mxu0 %v449
        %554 = vmatpush.msra.mxu0 %v445
        %555 = vmatpush.msra.mxu0 %v441
        %556 = vmatpush.msra.mxu0 %v437
        %557 = vmatpush.msra.mxu0 %v433
        %558 = vmatpush.msra.mxu0 %v429
        %559 = vmatpush.msra.mxu0 %v425
        %560 = vmatpush.msra.mxu0 %v421
        %561 = vmatpush.msra.mxu0 %v417
        %562 = vmatpush.msra.mxu0 %v413
        %563 = vmatpush.msra.mxu0 %v409
        %564 = vmatpush.msra.mxu0 %v405
        %565 = vmatpush.msra.mxu0 %v401
        %566 = vmatmul.f32.gmra.mxu0 %v549
        %v567 = vpop.f32.mrf.mxu0
        %v568 = vadd.f32 %v396, %v567
        %569 = vdwg.mxu0
        %570 = vmatpush.msra.mxu0 %v525
        %571 = vmatpush.msra.mxu0 %v521
        %572 = vmatpush.msra.mxu0 %v517
        %573 = vmatpush.msra.mxu0 %v513
        %574 = vmatpush.msra.mxu0 %v509
        %575 = vmatpush.msra.mxu0 %v505
        %576 = vmatpush.msra.mxu0 %v501
        %577 = vmatpush.msra.mxu0 %v497
        %578 = vmatpush.msra.mxu0 %v493
        %579 = vmatpush.msra.mxu0 %v489
        %580 = vmatpush.msra.mxu0 %v485
        %581 = vmatpush.msra.mxu0 %v481
        %582 = vmatpush.msra.mxu0 %v477
        %583 = vmatpush.msra.mxu0 %v473
        %584 = vmatpush.msra.mxu0 %v469
        %585 = vmatpush.msra.mxu0 %v465
        %586 = vmatmul.f32.gmra.mxu0 %v547
        %v587 = vpop.f32.mrf.mxu0
        %v588 = vadd.f32 %v568, %v587
        %589 = vdwg.mxu0
        %590 = vmatpush.msra.mxu0 %v462
        %591 = vmatpush.msra.mxu0 %v458
        %592 = vmatpush.msra.mxu0 %v454
        %593 = vmatpush.msra.mxu0 %v450
        %594 = vmatpush.msra.mxu0 %v446
        %595 = vmatpush.msra.mxu0 %v442
        %596 = vmatpush.msra.mxu0 %v438
        %597 = vmatpush.msra.mxu0 %v434
        %598 = vmatpush.msra.mxu0 %v430
        %599 = vmatpush.msra.mxu0 %v426
        %600 = vmatpush.msra.mxu0 %v422
        %601 = vmatpush.msra.mxu0 %v418
        %602 = vmatpush.msra.mxu0 %v414
        %603 = vmatpush.msra.mxu0 %v410
        %604 = vmatpush.msra.mxu0 %v406
        %605 = vmatpush.msra.mxu0 %v402
        %606 = vmatmul.f32.gmra.mxu0 %v549
        %v607 = vpop.f32.mrf.mxu0
        %v608 = vadd.f32 %v397, %v607
        %609 = vdwg.mxu0
        %610 = vmatpush.msra.mxu0 %v526
        %611 = vmatpush.msra.mxu0 %v522
        %612 = vmatpush.msra.mxu0 %v518
        %613 = vmatpush.msra.mxu0 %v514
        %614 = vmatpush.msra.mxu0 %v510
        %615 = vmatpush.msra.mxu0 %v506
        %616 = vmatpush.msra.mxu0 %v502
        %617 = vmatpush.msra.mxu0 %v498
        %618 = vmatpush.msra.mxu0 %v494
        %619 = vmatpush.msra.mxu0 %v490
        %620 = vmatpush.msra.mxu0 %v486
        %621 = vmatpush.msra.mxu0 %v482
        %622 = vmatpush.msra.mxu0 %v478
        %623 = vmatpush.msra.mxu0 %v474
        %624 = vmatpush.msra.mxu0 %v470
        %625 = vmatpush.msra.mxu0 %v466
        %626 = vmatmul.f32.gmra.mxu0 %v547
        %v627 = vpop.f32.mrf.mxu0
        %v628 = vadd.f32 %v608, %v627
        %629 = vdwg.mxu0
        %630 = vmatpush.msra.mxu0 %v463
        %631 = vmatpush.msra.mxu0 %v459
        %632 = vmatpush.msra.mxu0 %v455
        %633 = vmatpush.msra.mxu0 %v451
        %634 = vmatpush.msra.mxu0 %v447
        %635 = vmatpush.msra.mxu0 %v443
        %636 = vmatpush.msra.mxu0 %v439
        %637 = vmatpush.msra.mxu0 %v435
        %638 = vmatpush.msra.mxu0 %v431
        %639 = vmatpush.msra.mxu0 %v427
        %640 = vmatpush.msra.mxu0 %v423
        %641 = vmatpush.msra.mxu0 %v419
        %642 = vmatpush.msra.mxu0 %v415
        %643 = vmatpush.msra.mxu0 %v411
        %644 = vmatpush.msra.mxu0 %v407
        %645 = vmatpush.msra.mxu0 %v403
        %646 = vmatmul.f32.gmra.mxu0 %v549
        %v647 = vpop.f32.mrf.mxu0
        %v648 = vadd.f32 %v398, %v647
        %649 = vdwg.mxu0
        %650 = vmatpush.msra.mxu0 %v527
        %651 = vmatpush.msra.mxu0 %v523
        %652 = vmatpush.msra.mxu0 %v519
        %653 = vmatpush.msra.mxu0 %v515
        %654 = vmatpush.msra.mxu0 %v511
        %655 = vmatpush.msra.mxu0 %v507
        %656 = vmatpush.msra.mxu0 %v503
        %657 = vmatpush.msra.mxu0 %v499
        %658 = vmatpush.msra.mxu0 %v495
        %659 = vmatpush.msra.mxu0 %v491
        %660 = vmatpush.msra.mxu0 %v487
        %661 = vmatpush.msra.mxu0 %v483
        %662 = vmatpush.msra.mxu0 %v479
        %663 = vmatpush.msra.mxu0 %v475
        %664 = vmatpush.msra.mxu0 %v471
        %665 = vmatpush.msra.mxu0 %v467
        %666 = vmatmul.f32.gmra.mxu0 %v547
        %v667 = vpop.f32.mrf.mxu0
        %v668 = vadd.f32 %v648, %v667
        %669 = vdwg.mxu0
        %670 = vmatpush.msra.mxu0 %v464
        %671 = vmatpush.msra.mxu0 %v460
        %672 = vmatpush.msra.mxu0 %v456
        %673 = vmatpush.msra.mxu0 %v452
        %674 = vmatpush.msra.mxu0 %v448
        %675 = vmatpush.msra.mxu0 %v444
        %676 = vmatpush.msra.mxu0 %v440
        %677 = vmatpush.msra.mxu0 %v436
        %678 = vmatpush.msra.mxu0 %v432
        %679 = vmatpush.msra.mxu0 %v428
        %680 = vmatpush.msra.mxu0 %v424
        %681 = vmatpush.msra.mxu0 %v420
        %682 = vmatpush.msra.mxu0 %v416
        %683 = vmatpush.msra.mxu0 %v412
        %684 = vmatpush.msra.mxu0 %v408
        %685 = vmatpush.msra.mxu0 %v404
        %686 = vmatmul.f32.gmra.mxu0 %v549
        %v687 = vpop.f32.mrf.mxu0
        %v688 = vadd.f32 %v399, %v687
        %689 = vdwg.mxu0
        %690 = vmatpush.msra.mxu0 %v528
        %691 = vmatpush.msra.mxu0 %v524
        %692 = vmatpush.msra.mxu0 %v520
        %693 = vmatpush.msra.mxu0 %v516
        %694 = vmatpush.msra.mxu0 %v512
        %695 = vmatpush.msra.mxu0 %v508
        %696 = vmatpush.msra.mxu0 %v504
        %697 = vmatpush.msra.mxu0 %v500
        %698 = vmatpush.msra.mxu0 %v496
        %699 = vmatpush.msra.mxu0 %v492
        %700 = vmatpush.msra.mxu0 %v488
        %701 = vmatpush.msra.mxu0 %v484
        %702 = vmatpush.msra.mxu0 %v480
        %703 = vmatpush.msra.mxu0 %v476
        %704 = vmatpush.msra.mxu0 %v472
        %705 = vmatpush.msra.mxu0 %v468
        %706 = vmatmul.f32.gmra.mxu0 %v547
        %v707 = vpop.f32.mrf.mxu0
        %v708 = vadd.f32 %v688, %v707
        %709 = vdwg.mxu0
        %v710 = vxor.u32 %v588, 2147483648
        %v711 = vmul.f32 %v710, 1.442695
        %v712 = vpow.pop %v711
        %v713 = vadd.f32 %v712, 1.0
        %v714 = vrcp.pop %v713
        %v715 = vmul.f32 %v713, %v714
        %v716 = vsub.f32 1.0, %v715
        %v717 = vmul.f32 %v714, %v716
        %v718 = vadd.f32 %v714, %v717
        %vm719 = vweird.f32 %v713
        %vm720 = vweird.f32 %v714
        %vm721 = vmor %vm719, %vm720
        %v722 = vsel %vm721, %v714, %v718
        %v723 = vand.u32 2147483647, %v713
        %vm724 = vcmp.eq.f32.partialorder %v723, 8.507059e+37
        %v725 = vand.u32 %v713, 2147483648
        %v726 = vor.u32 1.1754944e-38, %v725
        %v727 = vsel %vm724, %v726, %v722
        %v728 = vmul.f32 1.0, %v727
        %v729 = vxor.u32 %v628, 2147483648
        %v730 = vmul.f32 %v729, 1.442695
        %v731 = vpow.pop %v730
        %v732 = vadd.f32 %v731, 1.0
        %v733 = vrcp.pop %v732
        %v734 = vmul.f32 %v732, %v733
        %v735 = vsub.f32 1.0, %v734
        %v736 = vmul.f32 %v733, %v735
        %v737 = vadd.f32 %v733, %v736
        %vm738 = vweird.f32 %v732
        %vm739 = vweird.f32 %v733
        %vm740 = vmor %vm738, %vm739
        %v741 = vsel %vm740, %v733, %v737
        %v742 = vand.u32 2147483647, %v732
        %vm743 = vcmp.eq.f32.partialorder %v742, 8.507059e+37
        %v744 = vand.u32 %v732, 2147483648
        %v745 = vor.u32 1.1754944e-38, %v744
        %v746 = vsel %vm743, %v745, %v741
        %v747 = vmul.f32 1.0, %v746
        %v748 = vtanh.pop %v668
        %v749 = vxor.u32 %v708, 2147483648
        %v750 = vmul.f32 %v749, 1.442695
        %v751 = vpow.pop %v750
        %v752 = vadd.f32 %v751, 1.0
        %v753 = vrcp.pop %v752
        %v754 = vmul.f32 %v752, %v753
        %v755 = vsub.f32 1.0, %v754
        %v756 = vmul.f32 %v753, %v755
        %v757 = vadd.f32 %v753, %v756
        %vm758 = vweird.f32 %v752
        %vm759 = vweird.f32 %v753
        %vm760 = vmor %vm758, %vm759
        %v761 = vsel %vm760, %v753, %v757
        %v762 = vand.u32 2147483647, %v752
        %vm763 = vcmp.eq.f32.partialorder %v762, 8.507059e+37
        %v764 = vand.u32 %v752, 2147483648
        %v765 = vor.u32 1.1754944e-38, %v764
        %v766 = vsel %vm763, %v765, %v761
        %v767 = vmul.f32 1.0, %v766
        %v768 = vmul.f32 %v747, %v548
        %v769 = vmul.f32 %v728, %v748
        %v770 = vadd.f32 %v768, %v769
        %v771 = vtanh.pop %v770
        %v772 = vmul.f32 %v767, %v771
        %v773 = vstv %s546
        %vm774 = vcmp.gt.s32.totalorder %v400, %v773
        %v776 = vperm.slane %v545, 0
        %778 = vmatpush.msra.mxu0 %v544
        %779 = vmatpush.msra.mxu0 %v543
        %780 = vmatpush.msra.mxu0 %v542
        %781 = vmatpush.msra.mxu0 %v541
        %782 = vmatpush.msra.mxu0 %v540
        %783 = vmatpush.msra.mxu0 %v539
        %784 = vmatpush.msra.mxu0 %v538
        %785 = vmatpush.msra.mxu0 %v537
        %786 = vmatpush.msra.mxu0 %v536
        %787 = vmatpush.msra.mxu0 %v535
        %788 = vmatpush.msra.mxu0 %v534
        %789 = vmatpush.msra.mxu0 %v533
        %790 = vmatpush.msra.mxu0 %v532
        %791 = vmatpush.msra.mxu0 %v531
        %792 = vmatpush.msra.mxu0 %v530
        %793 = vmatpush.msra.mxu0 %v529
        %794 = vmatmul.f32.gmra.mxu0 %v772
        %v795 = vpop.f32.mrf.mxu0
        %v796 = vadd.f32 %v776, %v795
        %797 = vdwg.mxu0
        %v798 = vsel %vm774, 1, 0
        %799 = vset.pattern.permute.xlu0 0
        %800 = vperm.xlu0 %799, %v798
        %v801 = vpop.permute.xlu0 %800
        %vm802 = vcmp.eq.s32.totalorder %v801, 1
        %v803 = vsel %vm802, %v796, 0.0
        %804 = vst [vmem:[%s385] sm:$0xff] %v803
        %v805 = vsel %vm802, %v772, %v547
        %v806 = vsel %vm802, %v770, %v548
        %s807 = scalar_lea.vmem %s342, 8 [#allocation9]
        %v808 = vld [vmem:[%s807] sm:$0xff]
        %809 = vmatpush.msra.mxu0 %v461
        %810 = vmatpush.msra.mxu0 %v457
        %811 = vmatpush.msra.mxu0 %v453
        %812 = vmatpush.msra.mxu0 %v449
        %813 = vmatpush.msra.mxu0 %v445
        %814 = vmatpush.msra.mxu0 %v441
        %815 = vmatpush.msra.mxu0 %v437
        %816 = vmatpush.msra.mxu0 %v433
        %817 = vmatpush.msra.mxu0 %v429
        %818 = vmatpush.msra.mxu0 %v425
        %819 = vmatpush.msra.mxu0 %v421
        %820 = vmatpush.msra.mxu0 %v417
        %821 = vmatpush.msra.mxu0 %v413
        %822 = vmatpush.msra.mxu0 %v409
        %823 = vmatpush.msra.mxu0 %v405
        %824 = vmatpush.msra.mxu0 %v401
        %825 = vmatmul.f32.gmra.mxu0 %v808
        %v826 = vpop.f32.mrf.mxu0
        %v827 = vadd.f32 %v396, %v826
        %828 = vdwg.mxu0
        %829 = vmatpush.msra.mxu0 %v525
        %830 = vmatpush.msra.mxu0 %v521
        %831 = vmatpush.msra.mxu0 %v517
        %832 = vmatpush.msra.mxu0 %v513
        %833 = vmatpush.msra.mxu0 %v509
        %834 = vmatpush.msra.mxu0 %v505
        %835 = vmatpush.msra.mxu0 %v501
        %836 = vmatpush.msra.mxu0 %v497
        %837 = vmatpush.msra.mxu0 %v493
        %838 = vmatpush.msra.mxu0 %v489
        %839 = vmatpush.msra.mxu0 %v485
        %840 = vmatpush.msra.mxu0 %v481
        %841 = vmatpush.msra.mxu0 %v477
        %842 = vmatpush.msra.mxu0 %v473
        %843 = vmatpush.msra.mxu0 %v469
        %844 = vmatpush.msra.mxu0 %v465
        %845 = vmatmul.f32.gmra.mxu0 %v805
        %v846 = vpop.f32.mrf.mxu0
        %v847 = vadd.f32 %v827, %v846
        %848 = vdwg.mxu0
        %849 = vmatpush.msra.mxu0 %v462
        %850 = vmatpush.msra.mxu0 %v458
        %851 = vmatpush.msra.mxu0 %v454
        %852 = vmatpush.msra.mxu0 %v450
        %853 = vmatpush.msra.mxu0 %v446
        %854 = vmatpush.msra.mxu0 %v442
        %855 = vmatpush.msra.mxu0 %v438
        %856 = vmatpush.msra.mxu0 %v434
        %857 = vmatpush.msra.mxu0 %v430
        %858 = vmatpush.msra.mxu0 %v426
        %859 = vmatpush.msra.mxu0 %v422
        %860 = vmatpush.msra.mxu0 %v418
        %861 = vmatpush.msra.mxu0 %v414
        %862 = vmatpush.msra.mxu0 %v410
        %863 = vmatpush.msra.mxu0 %v406
        %864 = vmatpush.msra.mxu0 %v402
        %865 = vmatmul.f32.gmra.mxu0 %v808
        %v866 = vpop.f32.mrf.mxu0
        %v867 = vadd.f32 %v397, %v866
        %868 = vdwg.mxu0
        %869 = vmatpush.msra.mxu0 %v526
        %870 = vmatpush.msra.mxu0 %v522
        %871 = vmatpush.msra.mxu0 %v518
        %872 = vmatpush.msra.mxu0 %v514
        %873 = vmatpush.msra.mxu0 %v510
        %874 = vmatpush.msra.mxu0 %v506
        %875 = vmatpush.msra.mxu0 %v502
        %876 = vmatpush.msra.mxu0 %v498
        %877 = vmatpush.msra.mxu0 %v494
        %878 = vmatpush.msra.mxu0 %v490
        %879 = vmatpush.msra.mxu0 %v486
        %880 = vmatpush.msra.mxu0 %v482
        %881 = vmatpush.msra.mxu0 %v478
        %882 = vmatpush.msra.mxu0 %v474
        %883 = vmatpush.msra.mxu0 %v470
        %884 = vmatpush.msra.mxu0 %v466
        %885 = vmatmul.f32.gmra.mxu0 %v805
        %v886 = vpop.f32.mrf.mxu0
        %v887 = vadd.f32 %v867, %v886
        %888 = vdwg.mxu0
        %889 = vmatpush.msra.mxu0 %v463
        %890 = vmatpush.msra.mxu0 %v459
        %891 = vmatpush.msra.mxu0 %v455
        %892 = vmatpush.msra.mxu0 %v451
        %893 = vmatpush.msra.mxu0 %v447
        %894 = vmatpush.msra.mxu0 %v443
        %895 = vmatpush.msra.mxu0 %v439
        %896 = vmatpush.msra.mxu0 %v435
        %897 = vmatpush.msra.mxu0 %v431
        %898 = vmatpush.msra.mxu0 %v427
        %899 = vmatpush.msra.mxu0 %v423
        %900 = vmatpush.msra.mxu0 %v419
        %901 = vmatpush.msra.mxu0 %v415
        %902 = vmatpush.msra.mxu0 %v411
        %903 = vmatpush.msra.mxu0 %v407
        %904 = vmatpush.msra.mxu0 %v403
        %905 = vmatmul.f32.gmra.mxu0 %v808
        %v906 = vpop.f32.mrf.mxu0
        %v907 = vadd.f32 %v398, %v906
        %908 = vdwg.mxu0
        %909 = vmatpush.msra.mxu0 %v527
        %910 = vmatpush.msra.mxu0 %v523
        %911 = vmatpush.msra.mxu0 %v519
        %912 = vmatpush.msra.mxu0 %v515
        %913 = vmatpush.msra.mxu0 %v511
        %914 = vmatpush.msra.mxu0 %v507
        %915 = vmatpush.msra.mxu0 %v503
        %916 = vmatpush.msra.mxu0 %v499
        %917 = vmatpush.msra.mxu0 %v495
        %918 = vmatpush.msra.mxu0 %v491
        %919 = vmatpush.msra.mxu0 %v487
        %920 = vmatpush.msra.mxu0 %v483
        %921 = vmatpush.msra.mxu0 %v479
        %922 = vmatpush.msra.mxu0 %v475
        %923 = vmatpush.msra.mxu0 %v471
        %924 = vmatpush.msra.mxu0 %v467
        %925 = vmatmul.f32.gmra.mxu0 %v805
        %v926 = vpop.f32.mrf.mxu0
        %v927 = vadd.f32 %v907, %v926
        %928 = vdwg.mxu0
        %929 = vmatpush.msra.mxu0 %v464
        %930 = vmatpush.msra.mxu0 %v460
        %931 = vmatpush.msra.mxu0 %v456
        %932 = vmatpush.msra.mxu0 %v452
        %933 = vmatpush.msra.mxu0 %v448
        %934 = vmatpush.msra.mxu0 %v444
        %935 = vmatpush.msra.mxu0 %v440
        %936 = vmatpush.msra.mxu0 %v436
        %937 = vmatpush.msra.mxu0 %v432
        %938 = vmatpush.msra.mxu0 %v428
        %939 = vmatpush.msra.mxu0 %v424
        %940 = vmatpush.msra.mxu0 %v420
        %941 = vmatpush.msra.mxu0 %v416
        %942 = vmatpush.msra.mxu0 %v412
        %943 = vmatpush.msra.mxu0 %v408
        %944 = vmatpush.msra.mxu0 %v404
        %945 = vmatmul.f32.gmra.mxu0 %v808
        %v946 = vpop.f32.mrf.mxu0
        %v947 = vadd.f32 %v399, %v946
        %948 = vdwg.mxu0
        %949 = vmatpush.msra.mxu0 %v528
        %950 = vmatpush.msra.mxu0 %v524
        %951 = vmatpush.msra.mxu0 %v520
        %952 = vmatpush.msra.mxu0 %v516
        %953 = vmatpush.msra.mxu0 %v512
        %954 = vmatpush.msra.mxu0 %v508
        %955 = vmatpush.msra.mxu0 %v504
        %956 = vmatpush.msra.mxu0 %v500
        %957 = vmatpush.msra.mxu0 %v496
        %958 = vmatpush.msra.mxu0 %v492
        %959 = vmatpush.msra.mxu0 %v488
        %960 = vmatpush.msra.mxu0 %v484
        %961 = vmatpush.msra.mxu0 %v480
        %962 = vmatpush.msra.mxu0 %v476
        %963 = vmatpush.msra.mxu0 %v472
        %964 = vmatpush.msra.mxu0 %v468
        %965 = vmatmul.f32.gmra.mxu0 %v805
        %v966 = vpop.f32.mrf.mxu0
        %v967 = vadd.f32 %v947, %v966
        %968 = vdwg.mxu0
        %v969 = vxor.u32 %v847, 2147483648
        %v970 = vmul.f32 %v969, 1.442695
        %v971 = vpow.pop %v970
        %v972 = vadd.f32 %v971, 1.0
        %v973 = vrcp.pop %v972
        %v974 = vmul.f32 %v972, %v973
        %v975 = vsub.f32 1.0, %v974
        %v976 = vmul.f32 %v973, %v975
        %v977 = vadd.f32 %v973, %v976
        %vm978 = vweird.f32 %v972
        %vm979 = vweird.f32 %v973
        %vm980 = vmor %vm978, %vm979
        %v981 = vsel %vm980, %v973, %v977
        %v982 = vand.u32 2147483647, %v972
        %vm983 = vcmp.eq.f32.partialorder %v982, 8.507059e+37
        %v984 = vand.u32 %v972, 2147483648
        %v985 = vor.u32 1.1754944e-38, %v984
        %v986 = vsel %vm983, %v985, %v981
        %v987 = vmul.f32 1.0, %v986
        %v988 = vxor.u32 %v887, 2147483648
        %v989 = vmul.f32 %v988, 1.442695
        %v990 = vpow.pop %v989
        %v991 = vadd.f32 %v990, 1.0
        %v992 = vrcp.pop %v991
        %v993 = vmul.f32 %v991, %v992
        %v994 = vsub.f32 1.0, %v993
        %v995 = vmul.f32 %v992, %v994
        %v996 = vadd.f32 %v992, %v995
        %vm997 = vweird.f32 %v991
        %vm998 = vweird.f32 %v992
        %vm999 = vmor %vm997, %vm998
        %v1000 = vsel %vm999, %v992, %v996
        %v1001 = vand.u32 2147483647, %v991
        %vm1002 = vcmp.eq.f32.partialorder %v1001, 8.507059e+37
        %v1003 = vand.u32 %v991, 2147483648
        %v1004 = vor.u32 1.1754944e-38, %v1003
        %v1005 = vsel %vm1002, %v1004, %v1000
        %v1006 = vmul.f32 1.0, %v1005
        %v1007 = vtanh.pop %v927
        %v1008 = vxor.u32 %v967, 2147483648
        %v1009 = vmul.f32 %v1008, 1.442695
        %v1010 = vpow.pop %v1009
        %v1011 = vadd.f32 %v1010, 1.0
        %v1012 = vrcp.pop %v1011
        %v1013 = vmul.f32 %v1011, %v1012
        %v1014 = vsub.f32 1.0, %v1013
        %v1015 = vmul.f32 %v1012, %v1014
        %v1016 = vadd.f32 %v1012, %v1015
        %vm1017 = vweird.f32 %v1011
        %vm1018 = vweird.f32 %v1012
        %vm1019 = vmor %vm1017, %vm1018
        %v1020 = vsel %vm1019, %v1012, %v1016
        %v1021 = vand.u32 2147483647, %v1011
        %vm1022 = vcmp.eq.f32.partialorder %v1021, 8.507059e+37
        %v1023 = vand.u32 %v1011, 2147483648
        %v1024 = vor.u32 1.1754944e-38, %v1023
        %v1025 = vsel %vm1022, %v1024, %v1020
        %v1026 = vmul.f32 1.0, %v1025
        %v1027 = vmul.f32 %v1006, %v806
        %v1028 = vmul.f32 %v987, %v1007
        %v1029 = vadd.f32 %v1027, %v1028
        %v1030 = vtanh.pop %v1029
        %v1031 = vmul.f32 %v1026, %v1030
        %s1032 = sadd.s32 %s546, 1
        %v1033 = vstv %s1032
        %vm1034 = vcmp.gt.s32.totalorder %v400, %v1033
        %1035 = vmatpush.msra.mxu0 %v544
        %1036 = vmatpush.msra.mxu0 %v543
        %1037 = vmatpush.msra.mxu0 %v542
        %1038 = vmatpush.msra.mxu0 %v541
        %1039 = vmatpush.msra.mxu0 %v540
        %1040 = vmatpush.msra.mxu0 %v539
        %1041 = vmatpush.msra.mxu0 %v538
        %1042 = vmatpush.msra.mxu0 %v537
        %1043 = vmatpush.msra.mxu0 %v536
        %1044 = vmatpush.msra.mxu0 %v535
        %1045 = vmatpush.msra.mxu0 %v534
        %1046 = vmatpush.msra.mxu0 %v533
        %1047 = vmatpush.msra.mxu0 %v532
        %1048 = vmatpush.msra.mxu0 %v531
        %1049 = vmatpush.msra.mxu0 %v530
        %1050 = vmatpush.msra.mxu0 %v529
        %1051 = vmatmul.f32.gmra.mxu0 %v1031
        %v1052 = vpop.f32.mrf.mxu0
        %v1053 = vadd.f32 %v776, %v1052
        %1054 = vdwg.mxu0
        %v1055 = vsel %vm1034, 1, 0
        %1056 = vset.pattern.permute.xlu0 0
        %1057 = vperm.xlu0 %1056, %v1055
        %v1058 = vpop.permute.xlu0 %1057
        %vm1059 = vcmp.eq.s32.totalorder %v1058, 1
        %v1060 = vsel %vm1059, %v1053, 0.0
        %s1061 = scalar_lea.vmem %s385, 8 [#allocation13]
        %1062 = vst [vmem:[%s1061] sm:$0xff] %v1060
        %v1063 = vsel %vm1059, %v1031, %v805
        %v1064 = vsel %vm1059, %v1029, %v806
        %s1065 = scalar_lea.vmem %s342, 16 [#allocation9]
        %v1066 = vld [vmem:[%s1065] sm:$0xff]
        %1067 = vmatpush.msra.mxu0 %v461
        %1068 = vmatpush.msra.mxu0 %v457
        %1069 = vmatpush.msra.mxu0 %v453
        %1070 = vmatpush.msra.mxu0 %v449
        %1071 = vmatpush.msra.mxu0 %v445
        %1072 = vmatpush.msra.mxu0 %v441
        %1073 = vmatpush.msra.mxu0 %v437
        %1074 = vmatpush.msra.mxu0 %v433
        %1075 = vmatpush.msra.mxu0 %v429
        %1076 = vmatpush.msra.mxu0 %v425
        %1077 = vmatpush.msra.mxu0 %v421
        %1078 = vmatpush.msra.mxu0 %v417
        %1079 = vmatpush.msra.mxu0 %v413
        %1080 = vmatpush.msra.mxu0 %v409
        %1081 = vmatpush.msra.mxu0 %v405
        %1082 = vmatpush.msra.mxu0 %v401
        %1083 = vmatmul.f32.gmra.mxu0 %v1066
        %v1084 = vpop.f32.mrf.mxu0
        %v1085 = vadd.f32 %v396, %v1084
        %1086 = vdwg.mxu0
        %1087 = vmatpush.msra.mxu0 %v525
        %1088 = vmatpush.msra.mxu0 %v521
        %1089 = vmatpush.msra.mxu0 %v517
        %1090 = vmatpush.msra.mxu0 %v513
        %1091 = vmatpush.msra.mxu0 %v509
        %1092 = vmatpush.msra.mxu0 %v505
        %1093 = vmatpush.msra.mxu0 %v501
        %1094 = vmatpush.msra.mxu0 %v497
        %1095 = vmatpush.msra.mxu0 %v493
        %1096 = vmatpush.msra.mxu0 %v489
        %1097 = vmatpush.msra.mxu0 %v485
        %1098 = vmatpush.msra.mxu0 %v481
        %1099 = vmatpush.msra.mxu0 %v477
        %1100 = vmatpush.msra.mxu0 %v473
        %1101 = vmatpush.msra.mxu0 %v469
        %1102 = vmatpush.msra.mxu0 %v465
        %1103 = vmatmul.f32.gmra.mxu0 %v1063
        %v1104 = vpop.f32.mrf.mxu0
        %v1105 = vadd.f32 %v1085, %v1104
        %1106 = vdwg.mxu0
        %1107 = vmatpush.msra.mxu0 %v462
        %1108 = vmatpush.msra.mxu0 %v458
        %1109 = vmatpush.msra.mxu0 %v454
        %1110 = vmatpush.msra.mxu0 %v450
        %1111 = vmatpush.msra.mxu0 %v446
        %1112 = vmatpush.msra.mxu0 %v442
        %1113 = vmatpush.msra.mxu0 %v438
        %1114 = vmatpush.msra.mxu0 %v434
        %1115 = vmatpush.msra.mxu0 %v430
        %1116 = vmatpush.msra.mxu0 %v426
        %1117 = vmatpush.msra.mxu0 %v422
        %1118 = vmatpush.msra.mxu0 %v418
        %1119 = vmatpush.msra.mxu0 %v414
        %1120 = vmatpush.msra.mxu0 %v410
        %1121 = vmatpush.msra.mxu0 %v406
        %1122 = vmatpush.msra.mxu0 %v402
        %1123 = vmatmul.f32.gmra.mxu0 %v1066
        %v1124 = vpop.f32.mrf.mxu0
        %v1125 = vadd.f32 %v397, %v1124
        %1126 = vdwg.mxu0
        %1127 = vmatpush.msra.mxu0 %v526
        %1128 = vmatpush.msra.mxu0 %v522
        %1129 = vmatpush.msra.mxu0 %v518
        %1130 = vmatpush.msra.mxu0 %v514
        %1131 = vmatpush.msra.mxu0 %v510
        %1132 = vmatpush.msra.mxu0 %v506
        %1133 = vmatpush.msra.mxu0 %v502
        %1134 = vmatpush.msra.mxu0 %v498
        %1135 = vmatpush.msra.mxu0 %v494
        %1136 = vmatpush.msra.mxu0 %v490
        %1137 = vmatpush.msra.mxu0 %v486
        %1138 = vmatpush.msra.mxu0 %v482
        %1139 = vmatpush.msra.mxu0 %v478
        %1140 = vmatpush.msra.mxu0 %v474
        %1141 = vmatpush.msra.mxu0 %v470
        %1142 = vmatpush.msra.mxu0 %v466
        %1143 = vmatmul.f32.gmra.mxu0 %v1063
        %v1144 = vpop.f32.mrf.mxu0
        %v1145 = vadd.f32 %v1125, %v1144
        %1146 = vdwg.mxu0
        %1147 = vmatpush.msra.mxu0 %v463
        %1148 = vmatpush.msra.mxu0 %v459
        %1149 = vmatpush.msra.mxu0 %v455
        %1150 = vmatpush.msra.mxu0 %v451
        %1151 = vmatpush.msra.mxu0 %v447
        %1152 = vmatpush.msra.mxu0 %v443
        %1153 = vmatpush.msra.mxu0 %v439
        %1154 = vmatpush.msra.mxu0 %v435
        %1155 = vmatpush.msra.mxu0 %v431
        %1156 = vmatpush.msra.mxu0 %v427
        %1157 = vmatpush.msra.mxu0 %v423
        %1158 = vmatpush.msra.mxu0 %v419
        %1159 = vmatpush.msra.mxu0 %v415
        %1160 = vmatpush.msra.mxu0 %v411
        %1161 = vmatpush.msra.mxu0 %v407
        %1162 = vmatpush.msra.mxu0 %v403
        %1163 = vmatmul.f32.gmra.mxu0 %v1066
        %v1164 = vpop.f32.mrf.mxu0
        %v1165 = vadd.f32 %v398, %v1164
        %1166 = vdwg.mxu0
        %1167 = vmatpush.msra.mxu0 %v527
        %1168 = vmatpush.msra.mxu0 %v523
        %1169 = vmatpush.msra.mxu0 %v519
        %1170 = vmatpush.msra.mxu0 %v515
        %1171 = vmatpush.msra.mxu0 %v511
        %1172 = vmatpush.msra.mxu0 %v507
        %1173 = vmatpush.msra.mxu0 %v503
        %1174 = vmatpush.msra.mxu0 %v499
        %1175 = vmatpush.msra.mxu0 %v495
        %1176 = vmatpush.msra.mxu0 %v491
        %1177 = vmatpush.msra.mxu0 %v487
        %1178 = vmatpush.msra.mxu0 %v483
        %1179 = vmatpush.msra.mxu0 %v479
        %1180 = vmatpush.msra.mxu0 %v475
        %1181 = vmatpush.msra.mxu0 %v471
        %1182 = vmatpush.msra.mxu0 %v467
        %1183 = vmatmul.f32.gmra.mxu0 %v1063
        %v1184 = vpop.f32.mrf.mxu0
        %v1185 = vadd.f32 %v1165, %v1184
        %1186 = vdwg.mxu0
        %1187 = vmatpush.msra.mxu0 %v464
        %1188 = vmatpush.msra.mxu0 %v460
        %1189 = vmatpush.msra.mxu0 %v456
        %1190 = vmatpush.msra.mxu0 %v452
        %1191 = vmatpush.msra.mxu0 %v448
        %1192 = vmatpush.msra.mxu0 %v444
        %1193 = vmatpush.msra.mxu0 %v440
        %1194 = vmatpush.msra.mxu0 %v436
        %1195 = vmatpush.msra.mxu0 %v432
        %1196 = vmatpush.msra.mxu0 %v428
        %1197 = vmatpush.msra.mxu0 %v424
        %1198 = vmatpush.msra.mxu0 %v420
        %1199 = vmatpush.msra.mxu0 %v416
        %1200 = vmatpush.msra.mxu0 %v412
        %1201 = vmatpush.msra.mxu0 %v408
        %1202 = vmatpush.msra.mxu0 %v404
        %1203 = vmatmul.f32.gmra.mxu0 %v1066
        %v1204 = vpop.f32.mrf.mxu0
        %v1205 = vadd.f32 %v399, %v1204
        %1206 = vdwg.mxu0
        %1207 = vmatpush.msra.mxu0 %v528
        %1208 = vmatpush.msra.mxu0 %v524
        %1209 = vmatpush.msra.mxu0 %v520
        %1210 = vmatpush.msra.mxu0 %v516
        %1211 = vmatpush.msra.mxu0 %v512
        %1212 = vmatpush.msra.mxu0 %v508
        %1213 = vmatpush.msra.mxu0 %v504
        %1214 = vmatpush.msra.mxu0 %v500
        %1215 = vmatpush.msra.mxu0 %v496
        %1216 = vmatpush.msra.mxu0 %v492
        %1217 = vmatpush.msra.mxu0 %v488
        %1218 = vmatpush.msra.mxu0 %v484
        %1219 = vmatpush.msra.mxu0 %v480
        %1220 = vmatpush.msra.mxu0 %v476
        %1221 = vmatpush.msra.mxu0 %v472
        %1222 = vmatpush.msra.mxu0 %v468
        %1223 = vmatmul.f32.gmra.mxu0 %v1063
        %v1224 = vpop.f32.mrf.mxu0
        %v1225 = vadd.f32 %v1205, %v1224
        %1226 = vdwg.mxu0
        %v1227 = vxor.u32 %v1105, 2147483648
        %v1228 = vmul.f32 %v1227, 1.442695
        %v1229 = vpow.pop %v1228
        %v1230 = vadd.f32 %v1229, 1.0
        %v1231 = vrcp.pop %v1230
        %v1232 = vmul.f32 %v1230, %v1231
        %v1233 = vsub.f32 1.0, %v1232
        %v1234 = vmul.f32 %v1231, %v1233
        %v1235 = vadd.f32 %v1231, %v1234
        %vm1236 = vweird.f32 %v1230
        %vm1237 = vweird.f32 %v1231
        %vm1238 = vmor %vm1236, %vm1237
        %v1239 = vsel %vm1238, %v1231, %v1235
        %v1240 = vand.u32 2147483647, %v1230
        %vm1241 = vcmp.eq.f32.partialorder %v1240, 8.507059e+37
        %v1242 = vand.u32 %v1230, 2147483648
        %v1243 = vor.u32 1.1754944e-38, %v1242
        %v1244 = vsel %vm1241, %v1243, %v1239
        %v1245 = vmul.f32 1.0, %v1244
        %v1246 = vxor.u32 %v1145, 2147483648
        %v1247 = vmul.f32 %v1246, 1.442695
        %v1248 = vpow.pop %v1247
        %v1249 = vadd.f32 %v1248, 1.0
        %v1250 = vrcp.pop %v1249
        %v1251 = vmul.f32 %v1249, %v1250
        %v1252 = vsub.f32 1.0, %v1251
        %v1253 = vmul.f32 %v1250, %v1252
        %v1254 = vadd.f32 %v1250, %v1253
        %vm1255 = vweird.f32 %v1249
        %vm1256 = vweird.f32 %v1250
        %vm1257 = vmor %vm1255, %vm1256
        %v1258 = vsel %vm1257, %v1250, %v1254
        %v1259 = vand.u32 2147483647, %v1249
        %vm1260 = vcmp.eq.f32.partialorder %v1259, 8.507059e+37
        %v1261 = vand.u32 %v1249, 2147483648
        %v1262 = vor.u32 1.1754944e-38, %v1261
        %v1263 = vsel %vm1260, %v1262, %v1258
        %v1264 = vmul.f32 1.0, %v1263
        %v1265 = vtanh.pop %v1185
        %v1266 = vxor.u32 %v1225, 2147483648
        %v1267 = vmul.f32 %v1266, 1.442695
        %v1268 = vpow.pop %v1267
        %v1269 = vadd.f32 %v1268, 1.0
        %v1270 = vrcp.pop %v1269
        %v1271 = vmul.f32 %v1269, %v1270
        %v1272 = vsub.f32 1.0, %v1271
        %v1273 = vmul.f32 %v1270, %v1272
        %v1274 = vadd.f32 %v1270, %v1273
        %vm1275 = vweird.f32 %v1269
        %vm1276 = vweird.f32 %v1270
        %vm1277 = vmor %vm1275, %vm1276
        %v1278 = vsel %vm1277, %v1270, %v1274
        %v1279 = vand.u32 2147483647, %v1269
        %vm1280 = vcmp.eq.f32.partialorder %v1279, 8.507059e+37
        %v1281 = vand.u32 %v1269, 2147483648
        %v1282 = vor.u32 1.1754944e-38, %v1281
        %v1283 = vsel %vm1280, %v1282, %v1278
        %v1284 = vmul.f32 1.0, %v1283
        %v1285 = vmul.f32 %v1264, %v1064
        %v1286 = vmul.f32 %v1245, %v1265
        %v1287 = vadd.f32 %v1285, %v1286
        %v1288 = vtanh.pop %v1287
        %v1289 = vmul.f32 %v1284, %v1288
        %s1290 = sadd.s32 %s546, 2
        %v1291 = vstv %s1290
        %vm1292 = vcmp.gt.s32.totalorder %v400, %v1291
        %1293 = vmatpush.msra.mxu0 %v544
        %1294 = vmatpush.msra.mxu0 %v543
        %1295 = vmatpush.msra.mxu0 %v542
        %1296 = vmatpush.msra.mxu0 %v541
        %1297 = vmatpush.msra.mxu0 %v540
        %1298 = vmatpush.msra.mxu0 %v539
        %1299 = vmatpush.msra.mxu0 %v538
        %1300 = vmatpush.msra.mxu0 %v537
        %1301 = vmatpush.msra.mxu0 %v536
        %1302 = vmatpush.msra.mxu0 %v535
        %1303 = vmatpush.msra.mxu0 %v534
        %1304 = vmatpush.msra.mxu0 %v533
        %1305 = vmatpush.msra.mxu0 %v532
        %1306 = vmatpush.msra.mxu0 %v531
        %1307 = vmatpush.msra.mxu0 %v530
        %1308 = vmatpush.msra.mxu0 %v529
        %1309 = vmatmul.f32.gmra.mxu0 %v1289
        %v1310 = vpop.f32.mrf.mxu0
        %v1311 = vadd.f32 %v776, %v1310
        %1312 = vdwg.mxu0
        %v1313 = vsel %vm1292, 1, 0
        %1314 = vset.pattern.permute.xlu0 0
        %1315 = vperm.xlu0 %1314, %v1313
        %v1316 = vpop.permute.xlu0 %1315
        %vm1317 = vcmp.eq.s32.totalorder %v1316, 1
        %v1318 = vsel %vm1317, %v1311, 0.0
        %s1319 = scalar_lea.vmem %s385, 16 [#allocation13]
        %1320 = vst [vmem:[%s1319] sm:$0xff] %v1318
        %v1321 = vsel %vm1317, %v1289, %v1063
        %v1322 = vsel %vm1317, %v1287, %v1064
        %s1323 = scalar_lea.vmem %s342, 24 [#allocation9]
        %v1324 = vld [vmem:[%s1323] sm:$0xff]
        %1325 = vmatpush.msra.mxu0 %v461
        %1326 = vmatpush.msra.mxu0 %v457
        %1327 = vmatpush.msra.mxu0 %v453
        %1328 = vmatpush.msra.mxu0 %v449
        %1329 = vmatpush.msra.mxu0 %v445
        %1330 = vmatpush.msra.mxu0 %v441
        %1331 = vmatpush.msra.mxu0 %v437
        %1332 = vmatpush.msra.mxu0 %v433
        %1333 = vmatpush.msra.mxu0 %v429
        %1334 = vmatpush.msra.mxu0 %v425
        %1335 = vmatpush.msra.mxu0 %v421
        %1336 = vmatpush.msra.mxu0 %v417
        %1337 = vmatpush.msra.mxu0 %v413
        %1338 = vmatpush.msra.mxu0 %v409
        %1339 = vmatpush.msra.mxu0 %v405
        %1340 = vmatpush.msra.mxu0 %v401
        %1341 = vmatmul.f32.gmra.mxu0 %v1324
        %v1342 = vpop.f32.mrf.mxu0
        %v1343 = vadd.f32 %v396, %v1342
        %1344 = vdwg.mxu0
        %1345 = vmatpush.msra.mxu0 %v525
        %1346 = vmatpush.msra.mxu0 %v521
        %1347 = vmatpush.msra.mxu0 %v517
        %1348 = vmatpush.msra.mxu0 %v513
        %1349 = vmatpush.msra.mxu0 %v509
        %1350 = vmatpush.msra.mxu0 %v505
        %1351 = vmatpush.msra.mxu0 %v501
        %1352 = vmatpush.msra.mxu0 %v497
        %1353 = vmatpush.msra.mxu0 %v493
        %1354 = vmatpush.msra.mxu0 %v489
        %1355 = vmatpush.msra.mxu0 %v485
        %1356 = vmatpush.msra.mxu0 %v481
        %1357 = vmatpush.msra.mxu0 %v477
        %1358 = vmatpush.msra.mxu0 %v473
        %1359 = vmatpush.msra.mxu0 %v469
        %1360 = vmatpush.msra.mxu0 %v465
        %1361 = vmatmul.f32.gmra.mxu0 %v1321
        %v1362 = vpop.f32.mrf.mxu0
        %v1363 = vadd.f32 %v1343, %v1362
        %1364 = vdwg.mxu0
        %1365 = vmatpush.msra.mxu0 %v462
        %1366 = vmatpush.msra.mxu0 %v458
        %1367 = vmatpush.msra.mxu0 %v454
        %1368 = vmatpush.msra.mxu0 %v450
        %1369 = vmatpush.msra.mxu0 %v446
        %1370 = vmatpush.msra.mxu0 %v442
        %1371 = vmatpush.msra.mxu0 %v438
        %1372 = vmatpush.msra.mxu0 %v434
        %1373 = vmatpush.msra.mxu0 %v430
        %1374 = vmatpush.msra.mxu0 %v426
        %1375 = vmatpush.msra.mxu0 %v422
        %1376 = vmatpush.msra.mxu0 %v418
        %1377 = vmatpush.msra.mxu0 %v414
        %1378 = vmatpush.msra.mxu0 %v410
        %1379 = vmatpush.msra.mxu0 %v406
        %1380 = vmatpush.msra.mxu0 %v402
        %1381 = vmatmul.f32.gmra.mxu0 %v1324
        %v1382 = vpop.f32.mrf.mxu0
        %v1383 = vadd.f32 %v397, %v1382
        %1384 = vdwg.mxu0
        %1385 = vmatpush.msra.mxu0 %v526
        %1386 = vmatpush.msra.mxu0 %v522
        %1387 = vmatpush.msra.mxu0 %v518
        %1388 = vmatpush.msra.mxu0 %v514
        %1389 = vmatpush.msra.mxu0 %v510
        %1390 = vmatpush.msra.mxu0 %v506
        %1391 = vmatpush.msra.mxu0 %v502
        %1392 = vmatpush.msra.mxu0 %v498
        %1393 = vmatpush.msra.mxu0 %v494
        %1394 = vmatpush.msra.mxu0 %v490
        %1395 = vmatpush.msra.mxu0 %v486
        %1396 = vmatpush.msra.mxu0 %v482
        %1397 = vmatpush.msra.mxu0 %v478
        %1398 = vmatpush.msra.mxu0 %v474
        %1399 = vmatpush.msra.mxu0 %v470
        %1400 = vmatpush.msra.mxu0 %v466
        %1401 = vmatmul.f32.gmra.mxu0 %v1321
        %v1402 = vpop.f32.mrf.mxu0
        %v1403 = vadd.f32 %v1383, %v1402
        %1404 = vdwg.mxu0
        %1405 = vmatpush.msra.mxu0 %v463
        %1406 = vmatpush.msra.mxu0 %v459
        %1407 = vmatpush.msra.mxu0 %v455
        %1408 = vmatpush.msra.mxu0 %v451
        %1409 = vmatpush.msra.mxu0 %v447
        %1410 = vmatpush.msra.mxu0 %v443
        %1411 = vmatpush.msra.mxu0 %v439
        %1412 = vmatpush.msra.mxu0 %v435
        %1413 = vmatpush.msra.mxu0 %v431
        %1414 = vmatpush.msra.mxu0 %v427
        %1415 = vmatpush.msra.mxu0 %v423
        %1416 = vmatpush.msra.mxu0 %v419
        %1417 = vmatpush.msra.mxu0 %v415
        %1418 = vmatpush.msra.mxu0 %v411
        %1419 = vmatpush.msra.mxu0 %v407
        %1420 = vmatpush.msra.mxu0 %v403
        %1421 = vmatmul.f32.gmra.mxu0 %v1324
        %v1422 = vpop.f32.mrf.mxu0
        %v1423 = vadd.f32 %v398, %v1422
        %1424 = vdwg.mxu0
        %1425 = vmatpush.msra.mxu0 %v527
        %1426 = vmatpush.msra.mxu0 %v523
        %1427 = vmatpush.msra.mxu0 %v519
        %1428 = vmatpush.msra.mxu0 %v515
        %1429 = vmatpush.msra.mxu0 %v511
        %1430 = vmatpush.msra.mxu0 %v507
        %1431 = vmatpush.msra.mxu0 %v503
        %1432 = vmatpush.msra.mxu0 %v499
        %1433 = vmatpush.msra.mxu0 %v495
        %1434 = vmatpush.msra.mxu0 %v491
        %1435 = vmatpush.msra.mxu0 %v487
        %1436 = vmatpush.msra.mxu0 %v483
        %1437 = vmatpush.msra.mxu0 %v479
        %1438 = vmatpush.msra.mxu0 %v475
        %1439 = vmatpush.msra.mxu0 %v471
        %1440 = vmatpush.msra.mxu0 %v467
        %1441 = vmatmul.f32.gmra.mxu0 %v1321
        %v1442 = vpop.f32.mrf.mxu0
        %v1443 = vadd.f32 %v1423, %v1442
        %1444 = vdwg.mxu0
        %1445 = vmatpush.msra.mxu0 %v464
        %1446 = vmatpush.msra.mxu0 %v460
        %1447 = vmatpush.msra.mxu0 %v456
        %1448 = vmatpush.msra.mxu0 %v452
        %1449 = vmatpush.msra.mxu0 %v448
        %1450 = vmatpush.msra.mxu0 %v444
        %1451 = vmatpush.msra.mxu0 %v440
        %1452 = vmatpush.msra.mxu0 %v436
        %1453 = vmatpush.msra.mxu0 %v432
        %1454 = vmatpush.msra.mxu0 %v428
        %1455 = vmatpush.msra.mxu0 %v424
        %1456 = vmatpush.msra.mxu0 %v420
        %1457 = vmatpush.msra.mxu0 %v416
        %1458 = vmatpush.msra.mxu0 %v412
        %1459 = vmatpush.msra.mxu0 %v408
        %1460 = vmatpush.msra.mxu0 %v404
        %1461 = vmatmul.f32.gmra.mxu0 %v1324
        %v1462 = vpop.f32.mrf.mxu0
        %v1463 = vadd.f32 %v399, %v1462
        %1464 = vdwg.mxu0
        %1465 = vmatpush.msra.mxu0 %v528
        %1466 = vmatpush.msra.mxu0 %v524
        %1467 = vmatpush.msra.mxu0 %v520
        %1468 = vmatpush.msra.mxu0 %v516
        %1469 = vmatpush.msra.mxu0 %v512
        %1470 = vmatpush.msra.mxu0 %v508
        %1471 = vmatpush.msra.mxu0 %v504
        %1472 = vmatpush.msra.mxu0 %v500
        %1473 = vmatpush.msra.mxu0 %v496
        %1474 = vmatpush.msra.mxu0 %v492
        %1475 = vmatpush.msra.mxu0 %v488
        %1476 = vmatpush.msra.mxu0 %v484
        %1477 = vmatpush.msra.mxu0 %v480
        %1478 = vmatpush.msra.mxu0 %v476
        %1479 = vmatpush.msra.mxu0 %v472
        %1480 = vmatpush.msra.mxu0 %v468
        %1481 = vmatmul.f32.gmra.mxu0 %v1321
        %v1482 = vpop.f32.mrf.mxu0
        %v1483 = vadd.f32 %v1463, %v1482
        %1484 = vdwg.mxu0
        %v1485 = vxor.u32 %v1363, 2147483648
        %v1486 = vmul.f32 %v1485, 1.442695
        %v1487 = vpow.pop %v1486
        %v1488 = vadd.f32 %v1487, 1.0
        %v1489 = vrcp.pop %v1488
        %v1490 = vmul.f32 %v1488, %v1489
        %v1491 = vsub.f32 1.0, %v1490
        %v1492 = vmul.f32 %v1489, %v1491
        %v1493 = vadd.f32 %v1489, %v1492
        %vm1494 = vweird.f32 %v1488
        %vm1495 = vweird.f32 %v1489
        %vm1496 = vmor %vm1494, %vm1495
        %v1497 = vsel %vm1496, %v1489, %v1493
        %v1498 = vand.u32 2147483647, %v1488
        %vm1499 = vcmp.eq.f32.partialorder %v1498, 8.507059e+37
        %v1500 = vand.u32 %v1488, 2147483648
        %v1501 = vor.u32 1.1754944e-38, %v1500
        %v1502 = vsel %vm1499, %v1501, %v1497
        %v1503 = vmul.f32 1.0, %v1502
        %v1504 = vxor.u32 %v1403, 2147483648
        %v1505 = vmul.f32 %v1504, 1.442695
        %v1506 = vpow.pop %v1505
        %v1507 = vadd.f32 %v1506, 1.0
        %v1508 = vrcp.pop %v1507
        %v1509 = vmul.f32 %v1507, %v1508
        %v1510 = vsub.f32 1.0, %v1509
        %v1511 = vmul.f32 %v1508, %v1510
        %v1512 = vadd.f32 %v1508, %v1511
        %vm1513 = vweird.f32 %v1507
        %vm1514 = vweird.f32 %v1508
        %vm1515 = vmor %vm1513, %vm1514
        %v1516 = vsel %vm1515, %v1508, %v1512
        %v1517 = vand.u32 2147483647, %v1507
        %vm1518 = vcmp.eq.f32.partialorder %v1517, 8.507059e+37
        %v1519 = vand.u32 %v1507, 2147483648
        %v1520 = vor.u32 1.1754944e-38, %v1519
        %v1521 = vsel %vm1518, %v1520, %v1516
        %v1522 = vmul.f32 1.0, %v1521
        %v1523 = vtanh.pop %v1443
        %v1524 = vxor.u32 %v1483, 2147483648
        %v1525 = vmul.f32 %v1524, 1.442695
        %v1526 = vpow.pop %v1525
        %v1527 = vadd.f32 %v1526, 1.0
        %v1528 = vrcp.pop %v1527
        %v1529 = vmul.f32 %v1527, %v1528
        %v1530 = vsub.f32 1.0, %v1529
        %v1531 = vmul.f32 %v1528, %v1530
        %v1532 = vadd.f32 %v1528, %v1531
        %vm1533 = vweird.f32 %v1527
        %vm1534 = vweird.f32 %v1528
        %vm1535 = vmor %vm1533, %vm1534
        %v1536 = vsel %vm1535, %v1528, %v1532
        %v1537 = vand.u32 2147483647, %v1527
        %vm1538 = vcmp.eq.f32.partialorder %v1537, 8.507059e+37
        %v1539 = vand.u32 %v1527, 2147483648
        %v1540 = vor.u32 1.1754944e-38, %v1539
        %v1541 = vsel %vm1538, %v1540, %v1536
        %v1542 = vmul.f32 1.0, %v1541
        %v1543 = vmul.f32 %v1522, %v1322
        %v1544 = vmul.f32 %v1503, %v1523
        %v1545 = vadd.f32 %v1543, %v1544
        %v1546 = vtanh.pop %v1545
        %v1547 = vmul.f32 %v1542, %v1546
        %s1548 = sadd.s32 %s546, 3
        %v1549 = vstv %s1548
        %vm1550 = vcmp.gt.s32.totalorder %v400, %v1549
        %1551 = vmatpush.msra.mxu0 %v544
        %1552 = vmatpush.msra.mxu0 %v543
        %1553 = vmatpush.msra.mxu0 %v542
        %1554 = vmatpush.msra.mxu0 %v541
        %1555 = vmatpush.msra.mxu0 %v540
        %1556 = vmatpush.msra.mxu0 %v539
        %1557 = vmatpush.msra.mxu0 %v538
        %1558 = vmatpush.msra.mxu0 %v537
        %1559 = vmatpush.msra.mxu0 %v536
        %1560 = vmatpush.msra.mxu0 %v535
        %1561 = vmatpush.msra.mxu0 %v534
        %1562 = vmatpush.msra.mxu0 %v533
        %1563 = vmatpush.msra.mxu0 %v532
        %1564 = vmatpush.msra.mxu0 %v531
        %1565 = vmatpush.msra.mxu0 %v530
        %1566 = vmatpush.msra.mxu0 %v529
        %1567 = vmatmul.f32.gmra.mxu0 %v1547
        %v1568 = vpop.f32.mrf.mxu0
        %v1569 = vadd.f32 %v776, %v1568
        %1570 = vdwg.mxu0
        %v1571 = vsel %vm1550, 1, 0
        %1572 = vset.pattern.permute.xlu0 0
        %1573 = vperm.xlu0 %1572, %v1571
        %v1574 = vpop.permute.xlu0 %1573
        %vm1575 = vcmp.eq.s32.totalorder %v1574, 1
        %v1576 = vsel %vm1575, %v1569, 0.0
        %s1577 = scalar_lea.vmem %s385, 24 [#allocation13]
        %1578 = vst [vmem:[%s1577] sm:$0xff] %v1576
        %v1579 = vsel %vm1575, %v1547, %v1321
        %v1580 = vsel %vm1575, %v1545, %v1322
        %1581 = vst [vmem:[#allocation2] sm:$0xff] %v1579
        %1582 = vst [vmem:[#allocation3] sm:$0xff] %v1580
        %s1583 = sand.u32 %s206, 1
        %s1584 = scalar_lea.sflag [#allocation6], %s1583
        %s1585 = sand.u32 %s206, 1
        %s1586 = smul.addr %s1585, 32
        %s1587 = scalar_lea.vmem [#allocation13], %s1586
        // Predicated region
        $region77: #{tpu_custom_call.1} parent=51 // pred_check
          %p1588 = pneg %p216
        $region78: #{tpu_custom_call.1} parent=51 // pred_check_branch
          %1590 = sbr.rel (%p1588) target = $region80
        $region79: #{tpu_custom_call.1} parent=51 // pred_region
          %s1591 = smul.u32 4, %s25
          %1593 = vsyncadd %s1584, 0
          %s1594 = smul.addr %s1591, 8
          %s1595 = scalar_lea.hbm %s8, %s1594
          %s1596 = sshll.u32 %s1587, 4
          %s1597 = int_to_ptr.vmem [resolvable:$true] %s1596
          %s1598 = sshll.u32 %s1595, 4
          %s1599 = int_to_ptr.hbm [resolvable:$true] %s1598
          %1604 = dma.vmem_to_hbm [thread:$0]  %s1597, 512, %s1599, %s1584, 128, 128, 8
        $region80: #{tpu_custom_call.1} parent=51 // pred_fallthru
          _
      $region52: #{tpu_custom_call.1} parent=5 // pred_fallthru
        _
      %p1605 = scmp.le.s32.totalorder 2, %s20
      // Predicated region
      $region81: #{tpu_custom_call.1} parent=5 // pred_check
        %p1606 = pneg %p1605
      $region82: #{tpu_custom_call.1} parent=5 // pred_check_branch
        %1608 = sbr.rel (%p1606) target = $region84
      $region83: #{tpu_custom_call.1} parent=5 // pred_region
        %s1609 = ssub.s32 %s20, 2
        // Predicated region
        $region85: #{tpu_custom_call.1} parent=83 // pred_check
          %p1610 = pneg %p222
        $region86: #{tpu_custom_call.1} parent=83 // pred_check_branch
          %1612 = sbr.rel (%p1610) target = $region88
        $region87: #{tpu_custom_call.1} parent=83 // pred_region
          %s1613 = sand.u32 %s207, 1
          %s1614 = scalar_lea.sflag [#allocation6], %s1613
          %s1615 = sand.u32 %s207, 1
          %s1616 = smul.addr %s1615, 32
          %s1617 = scalar_lea.vmem [#allocation13], %s1616
          %1619 = dma.done %s1614, 512
        $region88: #{tpu_custom_call.1} parent=83 // pred_fallthru
          _
      $region84: #{tpu_custom_call.1} parent=5 // pred_fallthru
        _
    $region6: #{tpu_custom_call.1} parent=1 // loop_footer
      %s24 = sadd.s32 1, %s20
    $region7: #{tpu_custom_call.1} parent=1 // loop_footer_branch
      %19 = sbr.rel target = $region3
    $region8: #{tpu_custom_call.1} parent=1 // loop_exit
      _
    %1620 = vsyncpa [#allocation5], 1
    %s1621 = scalar_lea.sflag [#allocation5], 1
    %1622 = vsyncpa %s1621, 1
    %1623 = vsyncpa [#allocation8], 1
    %1624 = vsyncpa [#allocation12], 1
    %1625 = vsyncpa [#allocation6], 1
    %s1626 = scalar_lea.sflag [#allocation6], 1
    %1627 = vsyncpa %s1626, 1

</llo_original>
